<compile_context>
chip_gen: v6e
topology: v6e:2x2x1
jax: 0.10.0
libtpu: 0.0.40
codegen_flags: <defaults>
</compile_context>

<pallas_src>
import math
import functools

import jax
import jax.numpy as jnp
from jax import lax
from jax.experimental import pallas as pl
from jax.experimental.pallas import tpu as pltpu


# ----------------------------------------------------------------------------
# In-kernel helpers
# ----------------------------------------------------------------------------
def _layer_norm(y, gamma, beta, eps):
    # gamma/beta: (1, H); biased variance (PyTorch LayerNorm semantics)
    mu = jnp.mean(y, axis=-1, keepdims=True)
    var = jnp.mean((y - mu) ** 2, axis=-1, keepdims=True)
    return gamma * (y - mu) * lax.rsqrt(var + eps) + beta


def _gelu_exact(z):
    # F.gelu default (exact, erf-based)
    return 0.5 * z * (1.0 + lax.erf(z * (1.0 / math.sqrt(2.0))))


# Row indices inside the packed per-layer parameter array pvec: (L, 9, H)
_BQ, _BK, _BV, _BAD, _BO, _G1, _BE1, _G2, _BE2 = range(9)


# ----------------------------------------------------------------------------
# Kernel 1: stack of BertLayers. grid = (batch_blocks, num_layers)
# ----------------------------------------------------------------------------
def bert_layers_kernel(x_ref, bias_ref,
                       wq_ref, wk_ref, wv_ref, wad_ref, wi_ref, wo_ref,
                       bi_ref, pvec_ref,
                       o_ref, h_ref,
                       *, num_heads, bb, seq, eps):
    l = pl.program_id(1)
    R, H = h_ref.shape                 # R = bb * seq rows of this batch block
    hd = H // num_heads
    bf16 = jnp.bfloat16

    # Residual stream lives in VMEM scratch across the layer grid axis.
    @pl.when(l == 0)
    def _():
        h_ref[...] = x_ref[...]

    h = h_ref[...]                     # (R, H) f32
    pv = pvec_ref[...]                 # (9, H) packed per-layer vectors
    bias = bias_ref[...]               # (bb, 1, S) additive mask bias (0 / -1e9)

    # --- Q/K/V projections: bf16 MXU, f32 accumulation (scale folded into wq/bq) ---
    xb = h.astype(bf16)
    q = jnp.dot(xb, wq_ref[...], preferred_element_type=jnp.float32) + pv[_BQ:_BQ + 1]
    k = jnp.dot(xb, wk_ref[...], preferred_element_type=jnp.float32) + pv[_BK:_BK + 1]
    v = jnp.dot(xb, wv_ref[...], preferred_element_type=jnp.float32) + pv[_BV:_BV + 1]

    # --- blocked attention: one head at a time, heads are static lane slices ---
    # (no (B, S, heads, hd) transpose relayouts; only one (bb, S, S) block live)
    ctx_parts = []
    for hh in range(num_heads):        # small fixed head count -> static lane slices
        s0 = hh * hd
        qh = q[:, s0:s0 + hd].reshape(bb, seq, hd).astype(bf16)
        kh = k[:, s0:s0 + hd].reshape(bb, seq, hd).astype(bf16)
        vh = v[:, s0:s0 + hd].reshape(bb, seq, hd).astype(bf16)

        sc = jnp.einsum('bqd,bkd->bqk', qh, kh,
                        preferred_element_type=jnp.float32)       # (bb, S, S)
        sc = sc + bias
        sc = sc - jnp.max(sc, axis=-1, keepdims=True)
        e = jnp.exp(sc)                                           # f32 softmax math
        p = e * pl.reciprocal(jnp.sum(e, axis=-1, keepdims=True), approx=True)
        ctx = jnp.einsum('bqk,bkd->bqd', p.astype(bf16), vh,
                         preferred_element_type=jnp.float32)      # (bb, S, hd)
        ctx_parts.append(ctx)

    attn = jnp.concatenate(ctx_parts, axis=-1).reshape(R, H)      # (R, H) f32

    # --- attention output dense + add & norm ---
    attn_out = (jnp.dot(attn.astype(bf16), wad_ref[...],
                        preferred_element_type=jnp.float32) + pv[_BAD:_BAD + 1])
    h = _layer_norm(h + attn_out, pv[_G1:_G1 + 1], pv[_BE1:_BE1 + 1], eps)

    # --- feed forward (intermediate dense + exact gelu, output dense) + add & norm ---
    z = (jnp.dot(h.astype(bf16), wi_ref[...],
                 preferred_element_type=jnp.float32) + bi_ref[...])
    z = _gelu_exact(z)                                            # f32 GELU (see TODO)
    ffn = (jnp.dot(z.astype(bf16), wo_ref[...],
                   preferred_element_type=jnp.float32) + pv[_BO:_BO + 1])
    h = _layer_norm(h + ffn, pv[_G2:_G2 + 1], pv[_BE2:_BE2 + 1], eps)

    h_ref[...] = h

    # Only the last layer's residual goes back to HBM.
    @pl.when(l == pl.num_programs(1) - 1)
    def _():
        o_ref[...] = h.astype(o_ref.dtype)


# ----------------------------------------------------------------------------
# Kernel 2: logits Linear, tiled over (row tiles, vocab tiles)
# ----------------------------------------------------------------------------
def logits_kernel(h_ref, w_ref, b_ref, o_ref):
    o_ref[...] = (jnp.dot(h_ref[...].astype(jnp.bfloat16), w_ref[...],
                          preferred_element_type=jnp.float32)
                  + b_ref[...]).astype(o_ref.dtype)


# ----------------------------------------------------------------------------
# Wrapper
# ----------------------------------------------------------------------------
def bert_fixed_embed_model(hidden, mask, layer_params, logits_w, logits_b,
                           *, num_heads, eps, out_dtype=None):
    B, S, H = hidden.shape
    assert H % num_heads == 0
    L = len(layer_params)
    hd = H // num_heads
    V = logits_w.shape[1]
    I = layer_params[0]["wi"].shape[1]
    bf16 = jnp.bfloat16
    scale = 1.0 / math.sqrt(hd)
    out_dtype = out_dtype or hidden.dtype     # bf16 recommended at real vocab sizes

    # Batch-block size: >=2 parallel blocks when B>=2 (v7x megacore) while keeping the
    # per-block row count modest; row count per block must stay sublane-aligned.
    bb = B
    if B >= 2:
        bb = max(1, min(B // 2, max(1, 1024 // S)))
        while B % bb:
            bb -= 1
    if (bb * S) % 8 != 0 and bb != B:
        bb = B
    nb = B // bb
    R = bb * S

    def stack(name):
        return jnp.stack([p[name] for p in layer_params])

    # Stacked per-layer matmul weights, pre-cast to bf16 (1/sqrt(hd) folded into wq/bq).
    wq = (stack("wq") * scale).astype(bf16)
    wk = stack("wk").astype(bf16)
    wv = stack("wv").astype(bf16)
    wad = stack("wad").astype(bf16)
    wi = stack("wi").astype(bf16)
    wo = stack("wo").astype(bf16)
    bi = stack("bi").reshape(L, 1, I)                     # (L, 1, I) f32

    # Pack the nine H-sized per-layer vectors into one array -> one DMA per layer step.
    pvec = jnp.stack([
        jnp.stack([p["bq"] * scale, p["bk"], p["bv"], p["bad"], p["bo"],
                   p["g1"], p["be1"], p["g2"], p["be2"]])
        for p in layer_params])                           # (L, 9, H) f32

    # Activations as (B*S, H) rows; additive mask bias (0 keep / -1e9 masked) per batch.
    x2 = hidden.reshape(B * S, H).astype(jnp.float32)
    m = mask.reshape(B, S).astype(jnp.float32)
    bias = ((m - 1.0) * 1000000000.0).reshape(B, 1, S)

    layer_args = [x2, bias, wq, wk, wv, wad, wi, wo, bi, pvec]
    in_specs = [
        pl.BlockSpec((R, H), lambda b, l: (b, 0)),            # x (per batch block)
        pl.BlockSpec((bb, 1, S), lambda b, l: (b, 0, 0)),     # mask bias
        pl.BlockSpec((None, H, H), lambda b, l: (l, 0, 0)),   # wq  (layer-indexed)
        pl.BlockSpec((None, H, H), lambda b, l: (l, 0, 0)),   # wk
        pl.BlockSpec((None, H, H), lambda b, l: (l, 0, 0)),   # wv
        pl.BlockSpec((None, H, H), lambda b, l: (l, 0, 0)),   # wad
        pl.BlockSpec((None, H, I), lambda b, l: (l, 0, 0)),   # wi
        pl.BlockSpec((None, I, H), lambda b, l: (l, 0, 0)),   # wo
        pl.BlockSpec((None, 1, I), lambda b, l: (l, 0, 0)),   # bi
        pl.BlockSpec((None, 9, H), lambda b, l: (l, 0, 0)),   # packed vectors
    ]

    h_final = pl.pallas_call(
        functools.partial(bert_layers_kernel,
                          num_heads=num_heads, bb=bb, seq=S, eps=eps),
        out_shape=jax.ShapeDtypeStruct((B * S, H), jnp.float32),
        grid_spec=pltpu.PrefetchScalarGridSpec(
            num_scalar_prefetch=0,
            grid=(nb, L),                                    # (parallel, arbitrary)
            in_specs=in_specs,
            out_specs=pl.BlockSpec((R, H), lambda b, l: (b, 0)),
            scratch_shapes=[pltpu.VMEM((R, H), jnp.float32)],
        ),
        compiler_params=pltpu.CompilerParams(
            dimension_semantics=("parallel", "arbitrary"),
            vmem_limit_bytes=32 * 1024 * 1024),
    )(*layer_args)

    # ---- logits: vocab-tiled matmul, lane-dense stores ----
    Vpad = -(-V // 128) * 128
    tn = min(512, Vpad)
    BS = B * S
    tm = min(256, -(-BS // 8) * 8)
    BSpad = -(-BS // tm) * tm
    if BSpad != BS:
        h_final = jnp.concatenate(
            [h_final, jnp.zeros((BSpad - BS, H), jnp.float32)], axis=0)

    lw = jnp.zeros((H, Vpad), jnp.float32).at[:, :V].set(logits_w).astype(bf16)
    lb = jnp.zeros((1, Vpad), jnp.float32).at[:, :V].set(logits_b)

    out = pl.pallas_call(
        logits_kernel,
        out_shape=jax.ShapeDtypeStruct((BSpad, Vpad), out_dtype),
        grid_spec=pltpu.PrefetchScalarGridSpec(
            num_scalar_prefetch=0,
            grid=(BSpad // tm, Vpad // tn),
            in_specs=[pl.BlockSpec((tm, H), lambda i, j: (i, 0)),
                      pl.BlockSpec((H, tn), lambda i, j: (0, j)),
                      pl.BlockSpec((1, tn), lambda i, j: (0, j))],
            out_specs=pl.BlockSpec((tm, tn), lambda i, j: (i, j)),
        ),
        compiler_params=pltpu.CompilerParams(
            dimension_semantics=("parallel", "parallel"),
            vmem_limit_bytes=32 * 1024 * 1024),
    )(h_final, lw, lb)

    return out[:BS, :V].reshape(B, S, V)


# ----------------------------------------------------------------------------
# Pure-JAX references for validation
# ----------------------------------------------------------------------------
def _ref_layer(x, mask, p, num_heads, eps):
    """Exact f32 PyTorch semantics for one BertLayer."""
    B, S, H = x.shape
    hd = H // num_heads

    def proj(x, w, b):
        y = x @ w + b
        return y.reshape(B, S, num_heads, hd).transpose(0, 2, 1, 3)

    q = proj(x, p["wq"], p["bq"])
    k = proj(x, p["wk"], p["bk"])
    v = proj(x, p["wv"], p["bv"])
    sc = jnp.einsum("bhqd,bhkd->bhqk", q, k) / math.sqrt(hd)
    sc = jnp.where(mask == 0, -1000000000.0, sc)
    pw = jax.nn.softmax(sc, axis=-1)
    av = jnp.einsum("bhqk,bhkd->bhqd", pw, v).transpose(0, 2, 1, 3).reshape(B, S, H)

    def ln(y, g, b):
        mu = y.mean(-1, keepdims=True)
        var = ((y - mu) ** 2).mean(-1, keepdims=True)
        return g * (y - mu) / jnp.sqrt(var + eps) + b

    src = ln(x + (av @ p["wad"] + p["bad"]), p["g1"], p["be1"])
    interm = jax.nn.gelu(src @ p["wi"] + p["bi"], approximate=False)
    src = ln(src + (interm @ p["wo"] + p["bo"]), p["g2"], p["be2"])
    return src


def _ref_model_f32(x, mask, layer_params, lw, lb, num_heads, eps):
    for p in layer_params:
        x = _ref_layer(x, mask, p, num_heads, eps)
    return x @ lw + lb


def _ref_model_matched(x, mask, layer_params, lw, lb, num_heads, eps):
    """Reference mirroring the kernel's bf16-matmul / f32-accumulate numeric path."""
    B, S, H = x.shape
    hd = H // num_heads
    scale = 1.0 / math.sqrt(hd)
    bf = jnp.bfloat16

    def mm(a, w):
        return jnp.dot(a.astype(bf), w.astype(bf), preferred_element_type=jnp.float32)

    def ln(y, g, b):
        mu = y.mean(-1, keepdims=True)
        var = ((y - mu) ** 2).mean(-1, keepdims=True)
        return g * (y - mu) / jnp.sqrt(var + eps) + b

    h = x.reshape(B * S, H)
    bias = (mask.reshape(B, S) - 1.0) * 1000000000.0
    for p in layer_params:
        q = mm(h, p["wq"] * scale) + p["bq"] * scale
        k = mm(h, p["wk"]) + p["bk"]
        v = mm(h, p["wv"]) + p["bv"]

        def heads(t):
            return t.reshape(B, S, num_heads, hd).transpose(0, 2, 1, 3).astype(bf)

        qh, kh, vh = heads(q), heads(k), heads(v)
        sc = jnp.einsum("bhqd,bhkd->bhqk", qh, kh, preferred_element_type=jnp.float32)
        sc = sc + bias[:, None, None, :]
        pr = jax.nn.softmax(sc, axis=-1)
        ctx = jnp.einsum("bhqk,bhkd->bhqd", pr.astype(bf), vh,
                         preferred_element_type=jnp.float32)
        attn = ctx.transpose(0, 2, 1, 3).reshape(B * S, H)

        h = ln(h + mm(attn, p["wad"]) + p["bad"], p["g1"], p["be1"])
        interm = jax.nn.gelu(mm(h, p["wi"]) + p["bi"], approximate=False)
        h = ln(h + mm(interm, p["wo"]) + p["bo"], p["g2"], p["be2"])
    return (mm(h, lw) + lb).reshape(B, S, -1)


# ----------------------------------------------------------------------------
# Main
# ----------------------------------------------------------------------------
if __name__ == "__main__":
    B, S, H = 2, 8, 32
    NUM_HEADS = 4
    INTERM = 64
    NUM_LAYERS = 2
    VOCAB = 40
    EPS = 1e-12

    key = jax.random.PRNGKey(0)

    def nrm(k, shape, scale=0.02):
        return (scale * jax.random.normal(k, shape)).astype(jnp.float32)

    layer_params = []
    for _ in range(NUM_LAYERS):
        ks = jax.random.split(key, 13)
        key = ks[0]
        layer_params.append({
            "wq": nrm(ks[1], (H, H)), "bq": nrm(ks[2], (H,)),
            "wk": nrm(ks[3], (H, H)), "bk": nrm(ks[4], (H,)),
            "wv": nrm(ks[5], (H, H)), "bv": nrm(ks[6], (H,)),
            "wad": nrm(ks[7], (H, H)), "bad": nrm(ks[8], (H,)),
            "g1": jnp.ones((H,), jnp.float32), "be1": jnp.zeros((H,), jnp.float32),
            "wi": nrm(ks[9], (H, INTERM)), "bi": nrm(ks[10], (INTERM,)),
            "wo": nrm(ks[11], (INTERM, H)), "bo": nrm(ks[12], (H,)),
            "g2": jnp.ones((H,), jnp.float32), "be2": jnp.zeros((H,), jnp.float32),
        })
    k1, k2, k3 = jax.random.split(key, 3)
    logits_w = nrm(k1, (H, VOCAB))
    logits_b = nrm(k2, (VOCAB,))

    hidden = jax.random.normal(k3, (B, S, H), dtype=jnp.float32)
    # deterministic mask: batch 0 fully visible, batch 1 has last 2 positions masked
    mask = jnp.ones((B, 1, 1, S), jnp.float32).at[1, 0, 0, -2:].set(0.0)

    out = bert_fixed_embed_model(hidden, mask, layer_params, logits_w, logits_b,
                                 num_heads=NUM_HEADS, eps=EPS)
    out = jax.block_until_ready(out)
    assert out.shape == (B, S, VOCAB)

    # Tight check vs. a reference that mirrors the kernel's bf16-matmul numeric path
    ref_m = _ref_model_matched(hidden, mask, layer_params, logits_w, logits_b,
                               NUM_HEADS, EPS)
    assert jnp.allclose(out, ref_m, atol=3e-4, rtol=3e-3), "mismatch vs bf16-matched reference"

    # Looser sanity check vs. exact f32 PyTorch semantics (tolerance covers bf16 matmul path)
    ref_f = _ref_model_f32(hidden, mask, layer_params, logits_w, logits_b, NUM_HEADS, EPS)
    assert jnp.allclose(out, ref_f, atol=1e-2, rtol=1e-2), "mismatch vs f32 reference"

    print("KERNEL_OK")
</pallas_src>

<mosaic_0001>
module attributes {stable_mosaic.version = 11 : i64} {
  func.func @bert_layers_kernel(%arg0: i32, %arg1: i32, %arg2: memref<8x32xf32, #tpu.memory_space<vmem>>, %arg3: memref<1x1x8xf32, #tpu.memory_space<vmem>>, %arg4: memref<1x32x32xbf16, #tpu.memory_space<vmem>>, %arg5: memref<1x32x32xbf16, #tpu.memory_space<vmem>>, %arg6: memref<1x32x32xbf16, #tpu.memory_space<vmem>>, %arg7: memref<1x32x32xbf16, #tpu.memory_space<vmem>>, %arg8: memref<1x32x64xbf16, #tpu.memory_space<vmem>>, %arg9: memref<1x64x32xbf16, #tpu.memory_space<vmem>>, %arg10: memref<1x1x64xf32, #tpu.memory_space<vmem>>, %arg11: memref<1x9x32xf32, #tpu.memory_space<vmem>>, %arg12: memref<8x32xf32, #tpu.memory_space<vmem>>, %arg13: memref<8x32xf32, #tpu.memory_space<vmem>>) attributes {dimension_semantics = [#tpu.dimension_semantics<parallel>, #tpu.dimension_semantics<arbitrary>], iteration_bounds = array<i64: 2, 2>, scalar_prefetch = 0 : i64, scratch_operands = 1 : i64, tpu.core_type = #tpu.core_type<tc>, window_params = [{transform_indices = @transform_0, window_bounds = array<i64: 8, 32>}, {transform_indices = @transform_1, window_bounds = array<i64: 1, 1, 8>}, {transform_indices = @transform_2, window_bounds = array<i64: 1, 32, 32>}, {transform_indices = @transform_3, window_bounds = array<i64: 1, 32, 32>}, {transform_indices = @transform_4, window_bounds = array<i64: 1, 32, 32>}, {transform_indices = @transform_5, window_bounds = array<i64: 1, 32, 32>}, {transform_indices = @transform_6, window_bounds = array<i64: 1, 32, 64>}, {transform_indices = @transform_7, window_bounds = array<i64: 1, 64, 32>}, {transform_indices = @transform_8, window_bounds = array<i64: 1, 1, 64>}, {transform_indices = @transform_9, window_bounds = array<i64: 1, 9, 32>}, {transform_indices = @transform_10, window_bounds = array<i64: 8, 32>}]} {
    %c0_i32 = arith.constant 0 : i32
    %0 = arith.cmpi eq, %arg1, %c0_i32 : i32
    %1 = arith.extui %0 : i1 to i32
    %c0_i32_0 = arith.constant 0 : i32
    %2 = arith.cmpi ne, %1, %c0_i32_0 : i32
    scf.if %2 {
      %c0_66 = arith.constant 0 : index
      %c0_67 = arith.constant 0 : index
      %208 = vector.load %arg2[%c0_66, %c0_67] : memref<8x32xf32, #tpu.memory_space<vmem>>, vector<8x32xf32>
      %c0_68 = arith.constant 0 : index
      %c0_69 = arith.constant 0 : index
      %209 = vector.load %arg13[%c0_68, %c0_69] : memref<8x32xf32, #tpu.memory_space<vmem>>, vector<8x32xf32>
      tpu.vector_store %arg13[%c0_68, %c0_69], %208 {strides = array<i32>} : memref<8x32xf32, #tpu.memory_space<vmem>>, vector<8x32xf32>,
    } else {
    }
    %c0 = arith.constant 0 : index
    %c0_1 = arith.constant 0 : index
    %3 = vector.load %arg13[%c0, %c0_1] : memref<8x32xf32, #tpu.memory_space<vmem>>, vector<8x32xf32>
    %c0_2 = arith.constant 0 : index
    %c0_3 = arith.constant 0 : index
    %c0_4 = arith.constant 0 : index
    %4 = vector.load %arg11[%c0_2, %c0_3, %c0_4] : memref<1x9x32xf32, #tpu.memory_space<vmem>>, vector<1x9x32xf32>
    %5 = vector.shape_cast %4 : vector<1x9x32xf32> to vector<9x32xf32>
    %c0_5 = arith.constant 0 : index
    %c0_6 = arith.constant 0 : index
    %c0_7 = arith.constant 0 : index
    %6 = vector.load %arg3[%c0_5, %c0_6, %c0_7] : memref<1x1x8xf32, #tpu.memory_space<vmem>>, vector<1x1x8xf32>
    %7 = arith.truncf %3 : vector<8x32xf32> to vector<8x32xbf16>
    %c0_8 = arith.constant 0 : index
    %c0_9 = arith.constant 0 : index
    %c0_10 = arith.constant 0 : index
    %8 = vector.load %arg4[%c0_8, %c0_9, %c0_10] : memref<1x32x32xbf16, #tpu.memory_space<vmem>>, vector<1x32x32xbf16>
    %9 = vector.shape_cast %8 : vector<1x32x32xbf16> to vector<32x32xbf16>
    %cst = arith.constant dense<0.000000e+00> : vector<8x32xf32>
    %10 = tpu.matmul %7, %9, %cst {dimension_numbers = #tpu.dot_dimension_numbers<[1], [0], [0], [1], [0, 0, 1, 1], [], []>} : vector<8x32xbf16>, vector<32x32xbf16>, vector<8x32xf32> -> vector<8x32xf32>
    %11 = vector.extract_strided_slice %5 {offsets = [0, 0], sizes = [1, 32], strides = [1, 1]} : vector<9x32xf32> to vector<1x32xf32>
    %12 = vector.broadcast %11 : vector<1x32xf32> to vector<8x32xf32>
    %13 = arith.addf %10, %12 : vector<8x32xf32>
    %c0_11 = arith.constant 0 : index
    %c0_12 = arith.constant 0 : index
    %c0_13 = arith.constant 0 : index
    %14 = vector.load %arg5[%c0_11, %c0_12, %c0_13] : memref<1x32x32xbf16, #tpu.memory_space<vmem>>, vector<1x32x32xbf16>
    %15 = vector.shape_cast %14 : vector<1x32x32xbf16> to vector<32x32xbf16>
    %cst_14 = arith.constant dense<0.000000e+00> : vector<8x32xf32>
    %16 = tpu.matmul %7, %15, %cst_14 {dimension_numbers = #tpu.dot_dimension_numbers<[1], [0], [0], [1], [0, 0, 1, 1], [], []>} : vector<8x32xbf16>, vector<32x32xbf16>, vector<8x32xf32> -> vector<8x32xf32>
    %17 = vector.extract_strided_slice %5 {offsets = [1, 0], sizes = [1, 32], strides = [1, 1]} : vector<9x32xf32> to vector<1x32xf32>
    %18 = vector.broadcast %17 : vector<1x32xf32> to vector<8x32xf32>
    %19 = arith.addf %16, %18 : vector<8x32xf32>
    %c0_15 = arith.constant 0 : index
    %c0_16 = arith.constant 0 : index
    %c0_17 = arith.constant 0 : index
    %20 = vector.load %arg6[%c0_15, %c0_16, %c0_17] : memref<1x32x32xbf16, #tpu.memory_space<vmem>>, vector<1x32x32xbf16>
    %21 = vector.shape_cast %20 : vector<1x32x32xbf16> to vector<32x32xbf16>
    %cst_18 = arith.constant dense<0.000000e+00> : vector<8x32xf32>
    %22 = tpu.matmul %7, %21, %cst_18 {dimension_numbers = #tpu.dot_dimension_numbers<[1], [0], [0], [1], [0, 0, 1, 1], [], []>} : vector<8x32xbf16>, vector<32x32xbf16>, vector<8x32xf32> -> vector<8x32xf32>
    %23 = vector.extract_strided_slice %5 {offsets = [2, 0], sizes = [1, 32], strides = [1, 1]} : vector<9x32xf32> to vector<1x32xf32>
    %24 = vector.broadcast %23 : vector<1x32xf32> to vector<8x32xf32>
    %25 = arith.addf %22, %24 : vector<8x32xf32>
    %26 = vector.extract_strided_slice %13 {offsets = [0, 0], sizes = [8, 8], strides = [1, 1]} : vector<8x32xf32> to vector<8x8xf32>
    %27 = vector.shape_cast %26 : vector<8x8xf32> to vector<1x8x8xf32>
    %28 = arith.truncf %27 : vector<1x8x8xf32> to vector<1x8x8xbf16>
    %29 = vector.extract_strided_slice %19 {offsets = [0, 0], sizes = [8, 8], strides = [1, 1]} : vector<8x32xf32> to vector<8x8xf32>
    %30 = vector.shape_cast %29 : vector<8x8xf32> to vector<1x8x8xf32>
    %31 = arith.truncf %30 : vector<1x8x8xf32> to vector<1x8x8xbf16>
    %32 = vector.extract_strided_slice %25 {offsets = [0, 0], sizes = [8, 8], strides = [1, 1]} : vector<8x32xf32> to vector<8x8xf32>
    %33 = vector.shape_cast %32 : vector<8x8xf32> to vector<1x8x8xf32>
    %34 = arith.truncf %33 : vector<1x8x8xf32> to vector<1x8x8xbf16>
    "tpu.trace_start"() <{level = 10 : i32, message = "bqd,bkd->bqk"}> : () -> ()
    %cst_19 = arith.constant dense<0.000000e+00> : vector<1x8x8xf32>
    %35 = tpu.matmul %28, %31, %cst_19 {dimension_numbers = #tpu.dot_dimension_numbers<[2], [2], [1], [1], [0, 0, 0, 1, 1, 1], [0], [0]>} : vector<1x8x8xbf16>, vector<1x8x8xbf16>, vector<1x8x8xf32> -> vector<1x8x8xf32>
    "tpu.trace_stop"() : () -> ()
    %36 = vector.broadcast %6 : vector<1x1x8xf32> to vector<1x8x8xf32>
    %37 = arith.addf %35, %36 : vector<1x8x8xf32>
    %cst_20 = arith.constant dense<0xFF800000> : vector<1x8xf32>
    %38 = vector.multi_reduction <maximumf>, %37, %cst_20 [2] : vector<1x8x8xf32> to vector<1x8xf32>
    %39 = vector.shape_cast %38 : vector<1x8xf32> to vector<1x8x1xf32>
    %40 = vector.broadcast %39 : vector<1x8x1xf32> to vector<1x8x8xf32>
    %41 = arith.subf %37, %40 : vector<1x8x8xf32>
    %42 = math.exp %41 : vector<1x8x8xf32>
    %cst_21 = arith.constant dense<0.000000e+00> : vector<1x8xf32>
    %43 = vector.multi_reduction <add>, %42, %cst_21 [2] : vector<1x8x8xf32> to vector<1x8xf32>
    %44 = vector.shape_cast %43 : vector<1x8xf32> to vector<1x8x1xf32>
    %45 = tpu.reciprocal %44 {approx = true} : vector<1x8x1xf32> -> vector<1x8x1xf32>
    %46 = vector.broadcast %45 : vector<1x8x1xf32> to vector<1x8x8xf32>
    %47 = arith.mulf %42, %46 : vector<1x8x8xf32>
    %48 = arith.truncf %47 : vector<1x8x8xf32> to vector<1x8x8xbf16>
    "tpu.trace_start"() <{level = 10 : i32, message = "bqk,bkd->bqd"}> : () -> ()
    %cst_22 = arith.constant dense<0.000000e+00> : vector<1x8x8xf32>
    %49 = tpu.matmul %48, %34, %cst_22 {dimension_numbers = #tpu.dot_dimension_numbers<[2], [1], [1], [2], [0, 0, 0, 1, 1, 2], [0], [0]>} : vector<1x8x8xbf16>, vector<1x8x8xbf16>, vector<1x8x8xf32> -> vector<1x8x8xf32>
    "tpu.trace_stop"() : () -> ()
    %50 = vector.extract_strided_slice %13 {offsets = [0, 8], sizes = [8, 8], strides = [1, 1]} : vector<8x32xf32> to vector<8x8xf32>
    %51 = vector.shape_cast %50 : vector<8x8xf32> to vector<1x8x8xf32>
    %52 = arith.truncf %51 : vector<1x8x8xf32> to vector<1x8x8xbf16>
    %53 = vector.extract_strided_slice %19 {offsets = [0, 8], sizes = [8, 8], strides = [1, 1]} : vector<8x32xf32> to vector<8x8xf32>
    %54 = vector.shape_cast %53 : vector<8x8xf32> to vector<1x8x8xf32>
    %55 = arith.truncf %54 : vector<1x8x8xf32> to vector<1x8x8xbf16>
    %56 = vector.extract_strided_slice %25 {offsets = [0, 8], sizes = [8, 8], strides = [1, 1]} : vector<8x32xf32> to vector<8x8xf32>
    %57 = vector.shape_cast %56 : vector<8x8xf32> to vector<1x8x8xf32>
    %58 = arith.truncf %57 : vector<1x8x8xf32> to vector<1x8x8xbf16>
    "tpu.trace_start"() <{level = 10 : i32, message = "bqd,bkd->bqk"}> : () -> ()
    %cst_23 = arith.constant dense<0.000000e+00> : vector<1x8x8xf32>
    %59 = tpu.matmul %52, %55, %cst_23 {dimension_numbers = #tpu.dot_dimension_numbers<[2], [2], [1], [1], [0, 0, 0, 1, 1, 1], [0], [0]>} : vector<1x8x8xbf16>, vector<1x8x8xbf16>, vector<1x8x8xf32> -> vector<1x8x8xf32>
    "tpu.trace_stop"() : () -> ()
    %60 = vector.broadcast %6 : vector<1x1x8xf32> to vector<1x8x8xf32>
    %61 = arith.addf %59, %60 : vector<1x8x8xf32>
    %cst_24 = arith.constant dense<0xFF800000> : vector<1x8xf32>
    %62 = vector.multi_reduction <maximumf>, %61, %cst_24 [2] : vector<1x8x8xf32> to vector<1x8xf32>
    %63 = vector.shape_cast %62 : vector<1x8xf32> to vector<1x8x1xf32>
    %64 = vector.broadcast %63 : vector<1x8x1xf32> to vector<1x8x8xf32>
    %65 = arith.subf %61, %64 : vector<1x8x8xf32>
    %66 = math.exp %65 : vector<1x8x8xf32>
    %cst_25 = arith.constant dense<0.000000e+00> : vector<1x8xf32>
    %67 = vector.multi_reduction <add>, %66, %cst_25 [2] : vector<1x8x8xf32> to vector<1x8xf32>
    %68 = vector.shape_cast %67 : vector<1x8xf32> to vector<1x8x1xf32>
    %69 = tpu.reciprocal %68 {approx = true} : vector<1x8x1xf32> -> vector<1x8x1xf32>
    %70 = vector.broadcast %69 : vector<1x8x1xf32> to vector<1x8x8xf32>
    %71 = arith.mulf %66, %70 : vector<1x8x8xf32>
    %72 = arith.truncf %71 : vector<1x8x8xf32> to vector<1x8x8xbf16>
    "tpu.trace_start"() <{level = 10 : i32, message = "bqk,bkd->bqd"}> : () -> ()
    %cst_26 = arith.constant dense<0.000000e+00> : vector<1x8x8xf32>
    %73 = tpu.matmul %72, %58, %cst_26 {dimension_numbers = #tpu.dot_dimension_numbers<[2], [1], [1], [2], [0, 0, 0, 1, 1, 2], [0], [0]>} : vector<1x8x8xbf16>, vector<1x8x8xbf16>, vector<1x8x8xf32> -> vector<1x8x8xf32>
    "tpu.trace_stop"() : () -> ()
    %74 = vector.extract_strided_slice %13 {offsets = [0, 16], sizes = [8, 8], strides = [1, 1]} : vector<8x32xf32> to vector<8x8xf32>
    %75 = vector.shape_cast %74 : vector<8x8xf32> to vector<1x8x8xf32>
    %76 = arith.truncf %75 : vector<1x8x8xf32> to vector<1x8x8xbf16>
    %77 = vector.extract_strided_slice %19 {offsets = [0, 16], sizes = [8, 8], strides = [1, 1]} : vector<8x32xf32> to vector<8x8xf32>
    %78 = vector.shape_cast %77 : vector<8x8xf32> to vector<1x8x8xf32>
    %79 = arith.truncf %78 : vector<1x8x8xf32> to vector<1x8x8xbf16>
    %80 = vector.extract_strided_slice %25 {offsets = [0, 16], sizes = [8, 8], strides = [1, 1]} : vector<8x32xf32> to vector<8x8xf32>
    %81 = vector.shape_cast %80 : vector<8x8xf32> to vector<1x8x8xf32>
    %82 = arith.truncf %81 : vector<1x8x8xf32> to vector<1x8x8xbf16>
    "tpu.trace_start"() <{level = 10 : i32, message = "bqd,bkd->bqk"}> : () -> ()
    %cst_27 = arith.constant dense<0.000000e+00> : vector<1x8x8xf32>
    %83 = tpu.matmul %76, %79, %cst_27 {dimension_numbers = #tpu.dot_dimension_numbers<[2], [2], [1], [1], [0, 0, 0, 1, 1, 1], [0], [0]>} : vector<1x8x8xbf16>, vector<1x8x8xbf16>, vector<1x8x8xf32> -> vector<1x8x8xf32>
    "tpu.trace_stop"() : () -> ()
    %84 = vector.broadcast %6 : vector<1x1x8xf32> to vector<1x8x8xf32>
    %85 = arith.addf %83, %84 : vector<1x8x8xf32>
    %cst_28 = arith.constant dense<0xFF800000> : vector<1x8xf32>
    %86 = vector.multi_reduction <maximumf>, %85, %cst_28 [2] : vector<1x8x8xf32> to vector<1x8xf32>
    %87 = vector.shape_cast %86 : vector<1x8xf32> to vector<1x8x1xf32>
    %88 = vector.broadcast %87 : vector<1x8x1xf32> to vector<1x8x8xf32>
    %89 = arith.subf %85, %88 : vector<1x8x8xf32>
    %90 = math.exp %89 : vector<1x8x8xf32>
    %cst_29 = arith.constant dense<0.000000e+00> : vector<1x8xf32>
    %91 = vector.multi_reduction <add>, %90, %cst_29 [2] : vector<1x8x8xf32> to vector<1x8xf32>
    %92 = vector.shape_cast %91 : vector<1x8xf32> to vector<1x8x1xf32>
    %93 = tpu.reciprocal %92 {approx = true} : vector<1x8x1xf32> -> vector<1x8x1xf32>
    %94 = vector.broadcast %93 : vector<1x8x1xf32> to vector<1x8x8xf32>
    %95 = arith.mulf %90, %94 : vector<1x8x8xf32>
    %96 = arith.truncf %95 : vector<1x8x8xf32> to vector<1x8x8xbf16>
    "tpu.trace_start"() <{level = 10 : i32, message = "bqk,bkd->bqd"}> : () -> ()
    %cst_30 = arith.constant dense<0.000000e+00> : vector<1x8x8xf32>
    %97 = tpu.matmul %96, %82, %cst_30 {dimension_numbers = #tpu.dot_dimension_numbers<[2], [1], [1], [2], [0, 0, 0, 1, 1, 2], [0], [0]>} : vector<1x8x8xbf16>, vector<1x8x8xbf16>, vector<1x8x8xf32> -> vector<1x8x8xf32>
    "tpu.trace_stop"() : () -> ()
    %98 = vector.extract_strided_slice %13 {offsets = [0, 24], sizes = [8, 8], strides = [1, 1]} : vector<8x32xf32> to vector<8x8xf32>
    %99 = vector.shape_cast %98 : vector<8x8xf32> to vector<1x8x8xf32>
    %100 = arith.truncf %99 : vector<1x8x8xf32> to vector<1x8x8xbf16>
    %101 = vector.extract_strided_slice %19 {offsets = [0, 24], sizes = [8, 8], strides = [1, 1]} : vector<8x32xf32> to vector<8x8xf32>
    %102 = vector.shape_cast %101 : vector<8x8xf32> to vector<1x8x8xf32>
    %103 = arith.truncf %102 : vector<1x8x8xf32> to vector<1x8x8xbf16>
    %104 = vector.extract_strided_slice %25 {offsets = [0, 24], sizes = [8, 8], strides = [1, 1]} : vector<8x32xf32> to vector<8x8xf32>
    %105 = vector.shape_cast %104 : vector<8x8xf32> to vector<1x8x8xf32>
    %106 = arith.truncf %105 : vector<1x8x8xf32> to vector<1x8x8xbf16>
    "tpu.trace_start"() <{level = 10 : i32, message = "bqd,bkd->bqk"}> : () -> ()
    %cst_31 = arith.constant dense<0.000000e+00> : vector<1x8x8xf32>
    %107 = tpu.matmul %100, %103, %cst_31 {dimension_numbers = #tpu.dot_dimension_numbers<[2], [2], [1], [1], [0, 0, 0, 1, 1, 1], [0], [0]>} : vector<1x8x8xbf16>, vector<1x8x8xbf16>, vector<1x8x8xf32> -> vector<1x8x8xf32>
    "tpu.trace_stop"() : () -> ()
    %108 = vector.broadcast %6 : vector<1x1x8xf32> to vector<1x8x8xf32>
    %109 = arith.addf %107, %108 : vector<1x8x8xf32>
    %cst_32 = arith.constant dense<0xFF800000> : vector<1x8xf32>
    %110 = vector.multi_reduction <maximumf>, %109, %cst_32 [2] : vector<1x8x8xf32> to vector<1x8xf32>
    %111 = vector.shape_cast %110 : vector<1x8xf32> to vector<1x8x1xf32>
    %112 = vector.broadcast %111 : vector<1x8x1xf32> to vector<1x8x8xf32>
    %113 = arith.subf %109, %112 : vector<1x8x8xf32>
    %114 = math.exp %113 : vector<1x8x8xf32>
    %cst_33 = arith.constant dense<0.000000e+00> : vector<1x8xf32>
    %115 = vector.multi_reduction <add>, %114, %cst_33 [2] : vector<1x8x8xf32> to vector<1x8xf32>
    %116 = vector.shape_cast %115 : vector<1x8xf32> to vector<1x8x1xf32>
    %117 = tpu.reciprocal %116 {approx = true} : vector<1x8x1xf32> -> vector<1x8x1xf32>
    %118 = vector.broadcast %117 : vector<1x8x1xf32> to vector<1x8x8xf32>
    %119 = arith.mulf %114, %118 : vector<1x8x8xf32>
    %120 = arith.truncf %119 : vector<1x8x8xf32> to vector<1x8x8xbf16>
    "tpu.trace_start"() <{level = 10 : i32, message = "bqk,bkd->bqd"}> : () -> ()
    %cst_34 = arith.constant dense<0.000000e+00> : vector<1x8x8xf32>
    %121 = tpu.matmul %120, %106, %cst_34 {dimension_numbers = #tpu.dot_dimension_numbers<[2], [1], [1], [2], [0, 0, 0, 1, 1, 2], [0], [0]>} : vector<1x8x8xbf16>, vector<1x8x8xbf16>, vector<1x8x8xf32> -> vector<1x8x8xf32>
    "tpu.trace_stop"() : () -> ()
    %122 = tpu.concatenate %49, %73, %97, %121 in 2 : vector<1x8x8xf32>, vector<1x8x8xf32>, vector<1x8x8xf32>, vector<1x8x8xf32> -> vector<1x8x32xf32>
    %123 = vector.shape_cast %122 : vector<1x8x32xf32> to vector<8x32xf32>
    %124 = arith.truncf %123 : vector<8x32xf32> to vector<8x32xbf16>
    %c0_35 = arith.constant 0 : index
    %c0_36 = arith.constant 0 : index
    %c0_37 = arith.constant 0 : index
    %125 = vector.load %arg7[%c0_35, %c0_36, %c0_37] : memref<1x32x32xbf16, #tpu.memory_space<vmem>>, vector<1x32x32xbf16>
    %126 = vector.shape_cast %125 : vector<1x32x32xbf16> to vector<32x32xbf16>
    %cst_38 = arith.constant dense<0.000000e+00> : vector<8x32xf32>
    %127 = tpu.matmul %124, %126, %cst_38 {dimension_numbers = #tpu.dot_dimension_numbers<[1], [0], [0], [1], [0, 0, 1, 1], [], []>} : vector<8x32xbf16>, vector<32x32xbf16>, vector<8x32xf32> -> vector<8x32xf32>
    %128 = vector.extract_strided_slice %5 {offsets = [3, 0], sizes = [1, 32], strides = [1, 1]} : vector<9x32xf32> to vector<1x32xf32>
    %129 = vector.broadcast %128 : vector<1x32xf32> to vector<8x32xf32>
    %130 = arith.addf %127, %129 : vector<8x32xf32>
    %131 = arith.addf %3, %130 : vector<8x32xf32>
    %132 = vector.extract_strided_slice %5 {offsets = [5, 0], sizes = [1, 32], strides = [1, 1]} : vector<9x32xf32> to vector<1x32xf32>
    %133 = vector.extract_strided_slice %5 {offsets = [6, 0], sizes = [1, 32], strides = [1, 1]} : vector<9x32xf32> to vector<1x32xf32>
    %cst_39 = arith.constant dense<0.000000e+00> : vector<8xf32>
    %134 = vector.multi_reduction <add>, %131, %cst_39 [1] : vector<8x32xf32> to vector<8xf32>
    %135 = vector.shape_cast %134 : vector<8xf32> to vector<8x1xf32>
    %cst_40 = arith.constant 3.200000e+01 : f32
    %136 = vector.broadcast %cst_40 : f32 to vector<8x1xf32>
    %137 = arith.divf %135, %136 : vector<8x1xf32>
    %138 = vector.broadcast %137 : vector<8x1xf32> to vector<8x32xf32>
    %139 = arith.subf %131, %138 : vector<8x32xf32>
    %140 = arith.mulf %139, %139 : vector<8x32xf32>
    %cst_41 = arith.constant dense<0.000000e+00> : vector<8xf32>
    %141 = vector.multi_reduction <add>, %140, %cst_41 [1] : vector<8x32xf32> to vector<8xf32>
    %142 = vector.shape_cast %141 : vector<8xf32> to vector<8x1xf32>
    %cst_42 = arith.constant 3.200000e+01 : f32
    %143 = vector.broadcast %cst_42 : f32 to vector<8x1xf32>
    %144 = arith.divf %142, %143 : vector<8x1xf32>
    %145 = vector.broadcast %137 : vector<8x1xf32> to vector<8x32xf32>
    %146 = arith.subf %131, %145 : vector<8x32xf32>
    %147 = vector.broadcast %132 : vector<1x32xf32> to vector<8x32xf32>
    %148 = arith.mulf %147, %146 : vector<8x32xf32>
    %cst_43 = arith.constant 9.99999996E-13 : f32
    %149 = vector.broadcast %cst_43 : f32 to vector<8x1xf32>
    %150 = arith.addf %144, %149 : vector<8x1xf32>
    %151 = math.rsqrt %150 : vector<8x1xf32>
    %152 = vector.broadcast %151 : vector<8x1xf32> to vector<8x32xf32>
    %153 = arith.mulf %148, %152 : vector<8x32xf32>
    %154 = vector.broadcast %133 : vector<1x32xf32> to vector<8x32xf32>
    %155 = arith.addf %153, %154 : vector<8x32xf32>
    %156 = arith.truncf %155 : vector<8x32xf32> to vector<8x32xbf16>
    %c0_44 = arith.constant 0 : index
    %c0_45 = arith.constant 0 : index
    %c0_46 = arith.constant 0 : index
    %157 = vector.load %arg8[%c0_44, %c0_45, %c0_46] : memref<1x32x64xbf16, #tpu.memory_space<vmem>>, vector<1x32x64xbf16>
    %158 = vector.shape_cast %157 : vector<1x32x64xbf16> to vector<32x64xbf16>
    %cst_47 = arith.constant dense<0.000000e+00> : vector<8x64xf32>
    %159 = tpu.matmul %156, %158, %cst_47 {dimension_numbers = #tpu.dot_dimension_numbers<[1], [0], [0], [1], [0, 0, 1, 1], [], []>} : vector<8x32xbf16>, vector<32x64xbf16>, vector<8x64xf32> -> vector<8x64xf32>
    %c0_48 = arith.constant 0 : index
    %c0_49 = arith.constant 0 : index
    %c0_50 = arith.constant 0 : index
    %160 = vector.load %arg10[%c0_48, %c0_49, %c0_50] : memref<1x1x64xf32, #tpu.memory_space<vmem>>, vector<1x1x64xf32>
    %161 = vector.shape_cast %160 : vector<1x1x64xf32> to vector<1x64xf32>
    %162 = vector.broadcast %161 : vector<1x64xf32> to vector<8x64xf32>
    %163 = arith.addf %159, %162 : vector<8x64xf32>
    %cst_51 = arith.constant 5.000000e-01 : f32
    %164 = vector.broadcast %cst_51 : f32 to vector<8x64xf32>
    %165 = arith.mulf %164, %163 : vector<8x64xf32>
    %cst_52 = arith.constant 0.707106769 : f32
    %166 = vector.broadcast %cst_52 : f32 to vector<8x64xf32>
    %167 = arith.mulf %163, %166 : vector<8x64xf32>
    %168 = math.erf %167 : vector<8x64xf32>
    %cst_53 = arith.constant 1.000000e+00 : f32
    %169 = vector.broadcast %cst_53 : f32 to vector<8x64xf32>
    %170 = arith.addf %169, %168 : vector<8x64xf32>
    %171 = arith.mulf %165, %170 : vector<8x64xf32>
    %172 = arith.truncf %171 : vector<8x64xf32> to vector<8x64xbf16>
    %c0_54 = arith.constant 0 : index
    %c0_55 = arith.constant 0 : index
    %c0_56 = arith.constant 0 : index
    %173 = vector.load %arg9[%c0_54, %c0_55, %c0_56] : memref<1x64x32xbf16, #tpu.memory_space<vmem>>, vector<1x64x32xbf16>
    %174 = vector.shape_cast %173 : vector<1x64x32xbf16> to vector<64x32xbf16>
    %cst_57 = arith.constant dense<0.000000e+00> : vector<8x32xf32>
    %175 = tpu.matmul %172, %174, %cst_57 {dimension_numbers = #tpu.dot_dimension_numbers<[1], [0], [0], [1], [0, 0, 1, 1], [], []>} : vector<8x64xbf16>, vector<64x32xbf16>, vector<8x32xf32> -> vector<8x32xf32>
    %176 = vector.extract_strided_slice %5 {offsets = [4, 0], sizes = [1, 32], strides = [1, 1]} : vector<9x32xf32> to vector<1x32xf32>
    %177 = vector.broadcast %176 : vector<1x32xf32> to vector<8x32xf32>
    %178 = arith.addf %175, %177 : vector<8x32xf32>
    %179 = arith.addf %155, %178 : vector<8x32xf32>
    %180 = vector.extract_strided_slice %5 {offsets = [7, 0], sizes = [1, 32], strides = [1, 1]} : vector<9x32xf32> to vector<1x32xf32>
    %181 = vector.extract_strided_slice %5 {offsets = [8, 0], sizes = [1, 32], strides = [1, 1]} : vector<9x32xf32> to vector<1x32xf32>
    %cst_58 = arith.constant dense<0.000000e+00> : vector<8xf32>
    %182 = vector.multi_reduction <add>, %179, %cst_58 [1] : vector<8x32xf32> to vector<8xf32>
    %183 = vector.shape_cast %182 : vector<8xf32> to vector<8x1xf32>
    %cst_59 = arith.constant 3.200000e+01 : f32
    %184 = vector.broadcast %cst_59 : f32 to vector<8x1xf32>
    %185 = arith.divf %183, %184 : vector<8x1xf32>
    %186 = vector.broadcast %185 : vector<8x1xf32> to vector<8x32xf32>
    %187 = arith.subf %179, %186 : vector<8x32xf32>
    %188 = arith.mulf %187, %187 : vector<8x32xf32>
    %cst_60 = arith.constant dense<0.000000e+00> : vector<8xf32>
    %189 = vector.multi_reduction <add>, %188, %cst_60 [1] : vector<8x32xf32> to vector<8xf32>
    %190 = vector.shape_cast %189 : vector<8xf32> to vector<8x1xf32>
    %cst_61 = arith.constant 3.200000e+01 : f32
    %191 = vector.broadcast %cst_61 : f32 to vector<8x1xf32>
    %192 = arith.divf %190, %191 : vector<8x1xf32>
    %193 = vector.broadcast %185 : vector<8x1xf32> to vector<8x32xf32>
    %194 = arith.subf %179, %193 : vector<8x32xf32>
    %195 = vector.broadcast %180 : vector<1x32xf32> to vector<8x32xf32>
    %196 = arith.mulf %195, %194 : vector<8x32xf32>
    %cst_62 = arith.constant 9.99999996E-13 : f32
    %197 = vector.broadcast %cst_62 : f32 to vector<8x1xf32>
    %198 = arith.addf %192, %197 : vector<8x1xf32>
    %199 = math.rsqrt %198 : vector<8x1xf32>
    %200 = vector.broadcast %199 : vector<8x1xf32> to vector<8x32xf32>
    %201 = arith.mulf %196, %200 : vector<8x32xf32>
    %202 = vector.broadcast %181 : vector<1x32xf32> to vector<8x32xf32>
    %203 = arith.addf %201, %202 : vector<8x32xf32>
    %c0_63 = arith.constant 0 : index
    %c0_64 = arith.constant 0 : index
    %204 = vector.load %arg13[%c0_63, %c0_64] : memref<8x32xf32, #tpu.memory_space<vmem>>, vector<8x32xf32>
    tpu.vector_store %arg13[%c0_63, %c0_64], %203 {strides = array<i32>} : memref<8x32xf32, #tpu.memory_space<vmem>>, vector<8x32xf32>,
    %c1_i32 = arith.constant 1 : i32
    %205 = arith.cmpi eq, %arg1, %c1_i32 : i32
    %206 = arith.extui %205 : i1 to i32
    %c0_i32_65 = arith.constant 0 : i32
    %207 = arith.cmpi ne, %206, %c0_i32_65 : i32
    scf.if %207 {
      %c0_66 = arith.constant 0 : index
      %c0_67 = arith.constant 0 : index
      %208 = vector.load %arg12[%c0_66, %c0_67] : memref<8x32xf32, #tpu.memory_space<vmem>>, vector<8x32xf32>
      tpu.vector_store %arg12[%c0_66, %c0_67], %203 {strides = array<i32>} : memref<8x32xf32, #tpu.memory_space<vmem>>, vector<8x32xf32>,
    } else {
    }
    return
  }
  func.func @transform_0(%arg0: i32, %arg1: i32) -> (i32, i32) {
    %c0_i32 = arith.constant 0 : i32
    %c0_i32_0 = arith.constant 0 : i32
    return %arg0, %c0_i32 : i32, i32
  }
  func.func @transform_1(%arg0: i32, %arg1: i32) -> (i32, i32, i32) {
    %c0_i32 = arith.constant 0 : i32
    %c0_i32_0 = arith.constant 0 : i32
    %c0_i32_1 = arith.constant 0 : i32
    return %arg0, %c0_i32, %c0_i32_0 : i32, i32, i32
  }
  func.func @transform_2(%arg0: i32, %arg1: i32) -> (i32, i32, i32) {
    %c0_i32 = arith.constant 0 : i32
    %c0_i32_0 = arith.constant 0 : i32
    %c0_i32_1 = arith.constant 0 : i32
    return %arg1, %c0_i32, %c0_i32_0 : i32, i32, i32
  }
  func.func @transform_3(%arg0: i32, %arg1: i32) -> (i32, i32, i32) {
    %c0_i32 = arith.constant 0 : i32
    %c0_i32_0 = arith.constant 0 : i32
    %c0_i32_1 = arith.constant 0 : i32
    return %arg1, %c0_i32, %c0_i32_0 : i32, i32, i32
  }
  func.func @transform_4(%arg0: i32, %arg1: i32) -> (i32, i32, i32) {
    %c0_i32 = arith.constant 0 : i32
    %c0_i32_0 = arith.constant 0 : i32
    %c0_i32_1 = arith.constant 0 : i32
    return %arg1, %c0_i32, %c0_i32_0 : i32, i32, i32
  }
  func.func @transform_5(%arg0: i32, %arg1: i32) -> (i32, i32, i32) {
    %c0_i32 = arith.constant 0 : i32
    %c0_i32_0 = arith.constant 0 : i32
    %c0_i32_1 = arith.constant 0 : i32
    return %arg1, %c0_i32, %c0_i32_0 : i32, i32, i32
  }
  func.func @transform_6(%arg0: i32, %arg1: i32) -> (i32, i32, i32) {
    %c0_i32 = arith.constant 0 : i32
    %c0_i32_0 = arith.constant 0 : i32
    %c0_i32_1 = arith.constant 0 : i32
    return %arg1, %c0_i32, %c0_i32_0 : i32, i32, i32
  }
  func.func @transform_7(%arg0: i32, %arg1: i32) -> (i32, i32, i32) {
    %c0_i32 = arith.constant 0 : i32
    %c0_i32_0 = arith.constant 0 : i32
    %c0_i32_1 = arith.constant 0 : i32
    return %arg1, %c0_i32, %c0_i32_0 : i32, i32, i32
  }
  func.func @transform_8(%arg0: i32, %arg1: i32) -> (i32, i32, i32) {
    %c0_i32 = arith.constant 0 : i32
    %c0_i32_0 = arith.constant 0 : i32
    %c0_i32_1 = arith.constant 0 : i32
    return %arg1, %c0_i32, %c0_i32_0 : i32, i32, i32
  }
  func.func @transform_9(%arg0: i32, %arg1: i32) -> (i32, i32, i32) {
    %c0_i32 = arith.constant 0 : i32
    %c0_i32_0 = arith.constant 0 : i32
    %c0_i32_1 = arith.constant 0 : i32
    return %arg1, %c0_i32, %c0_i32_0 : i32, i32, i32
  }
  func.func @transform_10(%arg0: i32, %arg1: i32) -> (i32, i32) {
    %c0_i32 = arith.constant 0 : i32
    %c0_i32_0 = arith.constant 0 : i32
    return %arg0, %c0_i32 : i32, i32
  }
}

</mosaic_0001>

<llo_original>
// kernel: tpu_custom_call.1
$region0: #{tpu_custom_call.1}
  #allocation0 [shape = 'u32[]', space=smem, size = 0x4, offset = 0x4, fixed_abs, tag = 'smem constant byte address 0x4 - core index']
  #allocation1 [shape = 'u32[144,128]{1,0:T(1,128)}', space=vmem, size = 0x12000, scoped, tag = 'internal scratch']
  #allocation2 [shape = 'f32[8,32]{1,0:T(8,128)}', space=vmem, size = 0x1000, scoped, tag = 'scratch operand']
  %s0 = inlined_call_operand.vmem [shape: f32[16,32], index: 0, kind: input, shape index: {}]
  %s1 = inlined_call_operand.vmem [shape: f32[2,1,8], index: 1, kind: input, shape index: {}]
  %s2 = inlined_call_operand.vmem [shape: bf16[2,32,32], index: 2, kind: input, shape index: {}]
  %s3 = inlined_call_operand.vmem [shape: bf16[2,32,32], index: 3, kind: input, shape index: {}]
  %s4 = inlined_call_operand.vmem [shape: bf16[2,32,32], index: 4, kind: input, shape index: {}]
  %s5 = inlined_call_operand.vmem [shape: bf16[2,32,32], index: 5, kind: input, shape index: {}]
  %s6 = inlined_call_operand.hbm [shape: bf16[2,32,64], index: 6, kind: input, shape index: {}]
  %s7 = inlined_call_operand.vmem [shape: bf16[2,64,32], index: 7, kind: input, shape index: {}]
  %s8 = inlined_call_operand.vmem [shape: f32[2,1,64], index: 8, kind: input, shape index: {}]
  %s9 = inlined_call_operand.vmem [shape: f32[2,9,32], index: 9, kind: input, shape index: {}]
  %s10 = inlined_call_operand.hbm [shape: f32[16,32], index: 10, kind: output, shape index: {}]
  %s11 = sld [smem:[#allocation0]]
  $region85: #{tpu_custom_call.1} parent=0
    _
  %s13 = ssub.s32 1, %s11
  %s14 = scalar_select 0, %s13, %s11
  $region1: #{tpu_custom_call.1} parent=0
    #allocation3 [shape = 'u8[16384]{0}', space=vmem, size = 0x4000, scoped, tag = 'input window, operand 6']
    #allocation4 [shape = 's32[2]{0}', space=sflag, size = 0x8, scoped, tag = 'scoped memory for tpu_custom_call.1']
    #allocation5 [shape = 's32[2]{0}', space=sflag, size = 0x8, scoped, tag = 'scoped memory for tpu_custom_call.1']
    #allocation6 [shape = 'u8[8192]{0}', space=vmem, size = 0x2000, scoped, tag = 'output window, operand 0']
    %15 = vsyncpa [#allocation4], 0
    %s16 = scalar_lea.sflag [#allocation4], 1
    %17 = vsyncpa %s16, 0
    %18 = vsyncpa [#allocation5], 0
    %s19 = scalar_lea.sflag [#allocation5], 1
    %20 = vsyncpa %s19, 0
    loop: start=0, step=1, limit=6
    $region2: #{tpu_custom_call.1} parent=1 // loop_pre_header
      _
    $region3: #{tpu_custom_call.1} parent=1 // loop_header
      %s22 = sphi 0, %s26
      %p23 = scmp.ge.s32.totalorder %s22, 6
      %s29 = sphi 0, %s41
      %s30 = sphi 0, %s37
      %s31 = sphi 0, %s29
      %s32 = sphi 0, %s30
      %s33 = sphi 0, %s31
      %s34 = sphi 0, %s32
      %s44 = sphi 0, %s46
      %s47 = sphi 0, %s44
      %s48 = sphi 0, %s47
      %s64 = sphi 0, %s48
      %s70 = sphi 0, %s72
      %s73 = sphi 0, %s70
      %s74 = sphi 0, %s73
      %s90 = sphi 0, %s74
      %s96 = sphi 0, %s98
      %s99 = sphi 0, %s96
      %s100 = sphi 0, %s99
      %s116 = sphi 0, %s100
      %s122 = sphi 0, %s124
      %s125 = sphi 0, %s122
      %s126 = sphi 0, %s125
      %s142 = sphi 0, %s126
      %s148 = sphi 0, %s150
      %s151 = sphi 0, %s148
      %s152 = sphi 0, %s151
      %s168 = sphi 0, %s152
      %s174 = sphi 0, %s176
      %s177 = sphi 0, %s174
      %s178 = sphi 0, %s177
      %s194 = sphi 0, %s178
      %s200 = sphi 0, %s202
      %s203 = sphi 0, %s200
      %s204 = sphi 0, %s203
      %s220 = sphi 0, %s204
      %s226 = sphi 0, %s228
      %s229 = sphi 0, %s226
      %s230 = sphi 0, %s229
      %s246 = sphi 0, %s230
      %s252 = sphi 0, %s254
      %s255 = sphi 0, %s252
      %s256 = sphi 0, %s255
      %s272 = sphi 0, %s256
      %s278 = sphi 0, %s280
      %s281 = sphi 0, %s278
      %s282 = sphi 0, %s281
      %s298 = sphi 0, %s282
      %s304 = sphi 0, %s306
      %s307 = sphi 0, %s304
      %s308 = sphi 0, %s307
      %s324 = sphi 0, %s308
    $region4: #{tpu_custom_call.1} parent=1 // loop_header_branch
      %25 = sbr.rel (%p23) target = $region8
    $region5: #{tpu_custom_call.1} parent=1 // loop_body
      %s27 = ssub.s32 %s22, 1
      %s28 = ssub.s32 %s22, 2
      %s35 = sadd.s32 1, %s30
      %p36 = scmp.ge.s32.totalorder %s35, 2
      %s37 = scalar_select %p36, 0, %s35
      %s38 = sadd.s32 1, %s29
      %s39 = scalar_select %p36, %s38, %s29
      %p40 = scmp.ge.s32.totalorder %s39, 2
      %s41 = scalar_select %p40, 0, %s39
      %s42 = ssub.s32 %s29, %s41
      %p43 = scmp.eq.s32.totalorder %s42, 0
      %s45 = sadd.s32 %s44, 1
      %s46 = scalar_select %p43, %s44, %s45
      %p49 = pneg %p43
      %p50 = scmp.eq.s32.totalorder %s22, 3
      %p51 = por %p49, %p50
      %p52 = scmp.ne.s32.totalorder %s44, %s47
      %p53 = scmp.eq.s32.totalorder %s22, 0
      %p54 = por %p52, %p53
      %p55 = scmp.ne.s32.totalorder %s44, %s47
      %p56 = scmp.eq.s32.totalorder %s27, 3
      %p57 = por %p55, %p56
      %p58 = scmp.ne.s32.totalorder %s47, %s48
      %p59 = scmp.eq.s32.totalorder %s27, 0
      %p60 = por %p58, %p59
      %p61 = scmp.ne.s32.totalorder %s47, %s48
      %p62 = scmp.eq.s32.totalorder %s28, 3
      %p63 = por %p61, %p62
      %p65 = scmp.ne.s32.totalorder %s48, %s64
      %p66 = scmp.eq.s32.totalorder %s28, 0
      %p67 = por %p65, %p66
      %s68 = ssub.s32 %s29, %s41
      %p69 = scmp.eq.s32.totalorder %s68, 0
      %s71 = sadd.s32 %s70, 1
      %s72 = scalar_select %p69, %s70, %s71
      %p75 = pneg %p69
      %p76 = scmp.eq.s32.totalorder %s22, 3
      %p77 = por %p75, %p76
      %p78 = scmp.ne.s32.totalorder %s70, %s73
      %p79 = scmp.eq.s32.totalorder %s22, 0
      %p80 = por %p78, %p79
      %p81 = scmp.ne.s32.totalorder %s70, %s73
      %p82 = scmp.eq.s32.totalorder %s27, 3
      %p83 = por %p81, %p82
      %p84 = scmp.ne.s32.totalorder %s73, %s74
      %p85 = scmp.eq.s32.totalorder %s27, 0
      %p86 = por %p84, %p85
      %p87 = scmp.ne.s32.totalorder %s73, %s74
      %p88 = scmp.eq.s32.totalorder %s28, 3
      %p89 = por %p87, %p88
      %p91 = scmp.ne.s32.totalorder %s74, %s90
      %p92 = scmp.eq.s32.totalorder %s28, 0
      %p93 = por %p91, %p92
      %s94 = ssub.s32 %s30, %s37
      %p95 = scmp.eq.s32.totalorder %s94, 0
      %s97 = sadd.s32 %s96, 1
      %s98 = scalar_select %p95, %s96, %s97
      %p101 = pneg %p95
      %p102 = scmp.eq.s32.totalorder %s22, 3
      %p103 = por %p101, %p102
      %p104 = scmp.ne.s32.totalorder %s96, %s99
      %p105 = scmp.eq.s32.totalorder %s22, 0
      %p106 = por %p104, %p105
      %p107 = scmp.ne.s32.totalorder %s96, %s99
      %p108 = scmp.eq.s32.totalorder %s27, 3
      %p109 = por %p107, %p108
      %p110 = scmp.ne.s32.totalorder %s99, %s100
      %p111 = scmp.eq.s32.totalorder %s27, 0
      %p112 = por %p110, %p111
      %p113 = scmp.ne.s32.totalorder %s99, %s100
      %p114 = scmp.eq.s32.totalorder %s28, 3
      %p115 = por %p113, %p114
      %p117 = scmp.ne.s32.totalorder %s100, %s116
      %p118 = scmp.eq.s32.totalorder %s28, 0
      %p119 = por %p117, %p118
      %s120 = ssub.s32 %s30, %s37
      %p121 = scmp.eq.s32.totalorder %s120, 0
      %s123 = sadd.s32 %s122, 1
      %s124 = scalar_select %p121, %s122, %s123
      %p127 = pneg %p121
      %p128 = scmp.eq.s32.totalorder %s22, 3
      %p129 = por %p127, %p128
      %p130 = scmp.ne.s32.totalorder %s122, %s125
      %p131 = scmp.eq.s32.totalorder %s22, 0
      %p132 = por %p130, %p131
      %p133 = scmp.ne.s32.totalorder %s122, %s125
      %p134 = scmp.eq.s32.totalorder %s27, 3
      %p135 = por %p133, %p134
      %p136 = scmp.ne.s32.totalorder %s125, %s126
      %p137 = scmp.eq.s32.totalorder %s27, 0
      %p138 = por %p136, %p137
      %p139 = scmp.ne.s32.totalorder %s125, %s126
      %p140 = scmp.eq.s32.totalorder %s28, 3
      %p141 = por %p139, %p140
      %p143 = scmp.ne.s32.totalorder %s126, %s142
      %p144 = scmp.eq.s32.totalorder %s28, 0
      %p145 = por %p143, %p144
      %s146 = ssub.s32 %s30, %s37
      %p147 = scmp.eq.s32.totalorder %s146, 0
      %s149 = sadd.s32 %s148, 1
      %s150 = scalar_select %p147, %s148, %s149
      %p153 = pneg %p147
      %p154 = scmp.eq.s32.totalorder %s22, 3
      %p155 = por %p153, %p154
      %p156 = scmp.ne.s32.totalorder %s148, %s151
      %p157 = scmp.eq.s32.totalorder %s22, 0
      %p158 = por %p156, %p157
      %p159 = scmp.ne.s32.totalorder %s148, %s151
      %p160 = scmp.eq.s32.totalorder %s27, 3
      %p161 = por %p159, %p160
      %p162 = scmp.ne.s32.totalorder %s151, %s152
      %p163 = scmp.eq.s32.totalorder %s27, 0
      %p164 = por %p162, %p163
      %p165 = scmp.ne.s32.totalorder %s151, %s152
      %p166 = scmp.eq.s32.totalorder %s28, 3
      %p167 = por %p165, %p166
      %p169 = scmp.ne.s32.totalorder %s152, %s168
      %p170 = scmp.eq.s32.totalorder %s28, 0
      %p171 = por %p169, %p170
      %s172 = ssub.s32 %s30, %s37
      %p173 = scmp.eq.s32.totalorder %s172, 0
      %s175 = sadd.s32 %s174, 1
      %s176 = scalar_select %p173, %s174, %s175
      %p179 = pneg %p173
      %p180 = scmp.eq.s32.totalorder %s22, 3
      %p181 = por %p179, %p180
      %p182 = scmp.ne.s32.totalorder %s174, %s177
      %p183 = scmp.eq.s32.totalorder %s22, 0
      %p184 = por %p182, %p183
      %p185 = scmp.ne.s32.totalorder %s174, %s177
      %p186 = scmp.eq.s32.totalorder %s27, 3
      %p187 = por %p185, %p186
      %p188 = scmp.ne.s32.totalorder %s177, %s178
      %p189 = scmp.eq.s32.totalorder %s27, 0
      %p190 = por %p188, %p189
      %p191 = scmp.ne.s32.totalorder %s177, %s178
      %p192 = scmp.eq.s32.totalorder %s28, 3
      %p193 = por %p191, %p192
      %p195 = scmp.ne.s32.totalorder %s178, %s194
      %p196 = scmp.eq.s32.totalorder %s28, 0
      %p197 = por %p195, %p196
      %s198 = ssub.s32 %s30, %s37
      %p199 = scmp.eq.s32.totalorder %s198, 0
      %s201 = sadd.s32 %s200, 1
      %s202 = scalar_select %p199, %s200, %s201
      %p205 = pneg %p199
      %p206 = scmp.eq.s32.totalorder %s22, 3
      %p207 = por %p205, %p206
      %p208 = scmp.ne.s32.totalorder %s200, %s203
      %p209 = scmp.eq.s32.totalorder %s22, 0
      %p210 = por %p208, %p209
      %p211 = scmp.ne.s32.totalorder %s200, %s203
      %p212 = scmp.eq.s32.totalorder %s27, 3
      %p213 = por %p211, %p212
      %p214 = scmp.ne.s32.totalorder %s203, %s204
      %p215 = scmp.eq.s32.totalorder %s27, 0
      %p216 = por %p214, %p215
      %p217 = scmp.ne.s32.totalorder %s203, %s204
      %p218 = scmp.eq.s32.totalorder %s28, 3
      %p219 = por %p217, %p218
      %p221 = scmp.ne.s32.totalorder %s204, %s220
      %p222 = scmp.eq.s32.totalorder %s28, 0
      %p223 = por %p221, %p222
      %s224 = ssub.s32 %s30, %s37
      %p225 = scmp.eq.s32.totalorder %s224, 0
      %s227 = sadd.s32 %s226, 1
      %s228 = scalar_select %p225, %s226, %s227
      %p231 = pneg %p225
      %p232 = scmp.eq.s32.totalorder %s22, 3
      %p233 = por %p231, %p232
      %p234 = scmp.ne.s32.totalorder %s226, %s229
      %p235 = scmp.eq.s32.totalorder %s22, 0
      %p236 = por %p234, %p235
      %p237 = scmp.ne.s32.totalorder %s226, %s229
      %p238 = scmp.eq.s32.totalorder %s27, 3
      %p239 = por %p237, %p238
      %p240 = scmp.ne.s32.totalorder %s229, %s230
      %p241 = scmp.eq.s32.totalorder %s27, 0
      %p242 = por %p240, %p241
      %p243 = scmp.ne.s32.totalorder %s229, %s230
      %p244 = scmp.eq.s32.totalorder %s28, 3
      %p245 = por %p243, %p244
      %p247 = scmp.ne.s32.totalorder %s230, %s246
      %p248 = scmp.eq.s32.totalorder %s28, 0
      %p249 = por %p247, %p248
      %s250 = ssub.s32 %s30, %s37
      %p251 = scmp.eq.s32.totalorder %s250, 0
      %s253 = sadd.s32 %s252, 1
      %s254 = scalar_select %p251, %s252, %s253
      %p257 = pneg %p251
      %p258 = scmp.eq.s32.totalorder %s22, 3
      %p259 = por %p257, %p258
      %p260 = scmp.ne.s32.totalorder %s252, %s255
      %p261 = scmp.eq.s32.totalorder %s22, 0
      %p262 = por %p260, %p261
      %p263 = scmp.ne.s32.totalorder %s252, %s255
      %p264 = scmp.eq.s32.totalorder %s27, 3
      %p265 = por %p263, %p264
      %p266 = scmp.ne.s32.totalorder %s255, %s256
      %p267 = scmp.eq.s32.totalorder %s27, 0
      %p268 = por %p266, %p267
      %p269 = scmp.ne.s32.totalorder %s255, %s256
      %p270 = scmp.eq.s32.totalorder %s28, 3
      %p271 = por %p269, %p270
      %p273 = scmp.ne.s32.totalorder %s256, %s272
      %p274 = scmp.eq.s32.totalorder %s28, 0
      %p275 = por %p273, %p274
      %s276 = ssub.s32 %s30, %s37
      %p277 = scmp.eq.s32.totalorder %s276, 0
      %s279 = sadd.s32 %s278, 1
      %s280 = scalar_select %p277, %s278, %s279
      %p283 = pneg %p277
      %p284 = scmp.eq.s32.totalorder %s22, 3
      %p285 = por %p283, %p284
      %p286 = scmp.ne.s32.totalorder %s278, %s281
      %p287 = scmp.eq.s32.totalorder %s22, 0
      %p288 = por %p286, %p287
      %p289 = scmp.ne.s32.totalorder %s278, %s281
      %p290 = scmp.eq.s32.totalorder %s27, 3
      %p291 = por %p289, %p290
      %p292 = scmp.ne.s32.totalorder %s281, %s282
      %p293 = scmp.eq.s32.totalorder %s27, 0
      %p294 = por %p292, %p293
      %p295 = scmp.ne.s32.totalorder %s281, %s282
      %p296 = scmp.eq.s32.totalorder %s28, 3
      %p297 = por %p295, %p296
      %p299 = scmp.ne.s32.totalorder %s282, %s298
      %p300 = scmp.eq.s32.totalorder %s28, 0
      %p301 = por %p299, %p300
      %s302 = ssub.s32 %s29, %s41
      %p303 = scmp.eq.s32.totalorder %s302, 0
      %s305 = sadd.s32 %s304, 1
      %s306 = scalar_select %p303, %s304, %s305
      %p309 = pneg %p303
      %p310 = scmp.eq.s32.totalorder %s22, 3
      %p311 = por %p309, %p310
      %p312 = scmp.ne.s32.totalorder %s304, %s307
      %p313 = scmp.eq.s32.totalorder %s22, 0
      %p314 = por %p312, %p313
      %p315 = scmp.ne.s32.totalorder %s304, %s307
      %p316 = scmp.eq.s32.totalorder %s27, 3
      %p317 = por %p315, %p316
      %p318 = scmp.ne.s32.totalorder %s307, %s308
      %p319 = scmp.eq.s32.totalorder %s27, 0
      %p320 = por %p318, %p319
      %p321 = scmp.ne.s32.totalorder %s307, %s308
      %p322 = scmp.eq.s32.totalorder %s28, 3
      %p323 = por %p321, %p322
      %p325 = scmp.ne.s32.totalorder %s308, %s324
      %p326 = scmp.eq.s32.totalorder %s28, 0
      %p327 = por %p325, %p326
      %p328 = scmp.le.s32.totalorder 1, %s22
      %p329 = scmp.lt.s32.totalorder %s22, 5
      %p330 = pnand %p328, %p329
      %p331 = pneg %p330
      // Predicated region
      $region9: #{tpu_custom_call.1} parent=5 // pred_check
        _
      $region10: #{tpu_custom_call.1} parent=5 // pred_check_branch
        %333 = sbr.rel (%p330) target = $region12
      $region11: #{tpu_custom_call.1} parent=5 // pred_region
        %s334 = ssub.s32 %s22, 1
      $region12: #{tpu_custom_call.1} parent=5 // pred_fallthru
        _
      %p335 = scmp.lt.s32.totalorder %s22, 4
      // Predicated region
      $region13: #{tpu_custom_call.1} parent=5 // pred_check
        %p336 = pneg %p335
      $region14: #{tpu_custom_call.1} parent=5 // pred_check_branch
        %338 = sbr.rel (%p336) target = $region16
      $region15: #{tpu_custom_call.1} parent=5 // pred_region
        // Predicated region
        $region17: #{tpu_custom_call.1} parent=15 // pred_check
          %p339 = pneg %p54
        $region18: #{tpu_custom_call.1} parent=15 // pred_check_branch
          %341 = sbr.rel (%p339) target = $region20
        $region19: #{tpu_custom_call.1} parent=15 // pred_region
          %p342 = scmp.lt.s32.totalorder %s29, 1
          %s343 = scalar_select %p342, %s29, 1
          %s344 = smul.addr %s343, 8
          %s345 = scalar_lea.vmem %s0, %s344
        $region20: #{tpu_custom_call.1} parent=15 // pred_fallthru
          _
        // Predicated region
        $region21: #{tpu_custom_call.1} parent=15 // pred_check
          %p346 = pneg %p80
        $region22: #{tpu_custom_call.1} parent=15 // pred_check_branch
          %348 = sbr.rel (%p346) target = $region24
        $region23: #{tpu_custom_call.1} parent=15 // pred_region
          %p349 = scmp.lt.s32.totalorder %s29, 1
          %s350 = scalar_select %p349, %s29, 1
          %s351 = scalar_lea.vmem %s1, %s350
        $region24: #{tpu_custom_call.1} parent=15 // pred_fallthru
          _
        // Predicated region
        $region25: #{tpu_custom_call.1} parent=15 // pred_check
          %p352 = pneg %p106
        $region26: #{tpu_custom_call.1} parent=15 // pred_check_branch
          %354 = sbr.rel (%p352) target = $region28
        $region27: #{tpu_custom_call.1} parent=15 // pred_region
          %p355 = scmp.lt.s32.totalorder %s30, 1
          %s356 = scalar_select %p355, %s30, 1
          %s357 = smul.addr %s356, 4
          %s358 = smul.addr %s357, 4
          %s359 = scalar_lea.vmem %s2, %s358
        $region28: #{tpu_custom_call.1} parent=15 // pred_fallthru
          _
        // Predicated region
        $region29: #{tpu_custom_call.1} parent=15 // pred_check
          %p360 = pneg %p132
        $region30: #{tpu_custom_call.1} parent=15 // pred_check_branch
          %362 = sbr.rel (%p360) target = $region32
        $region31: #{tpu_custom_call.1} parent=15 // pred_region
          %p363 = scmp.lt.s32.totalorder %s30, 1
          %s364 = scalar_select %p363, %s30, 1
          %s365 = smul.addr %s364, 4
          %s366 = smul.addr %s365, 4
          %s367 = scalar_lea.vmem %s3, %s366
        $region32: #{tpu_custom_call.1} parent=15 // pred_fallthru
          _
        // Predicated region
        $region33: #{tpu_custom_call.1} parent=15 // pred_check
          %p368 = pneg %p158
        $region34: #{tpu_custom_call.1} parent=15 // pred_check_branch
          %370 = sbr.rel (%p368) target = $region36
        $region35: #{tpu_custom_call.1} parent=15 // pred_region
          %p371 = scmp.lt.s32.totalorder %s30, 1
          %s372 = scalar_select %p371, %s30, 1
          %s373 = smul.addr %s372, 4
          %s374 = smul.addr %s373, 4
          %s375 = scalar_lea.vmem %s4, %s374
        $region36: #{tpu_custom_call.1} parent=15 // pred_fallthru
          _
        // Predicated region
        $region37: #{tpu_custom_call.1} parent=15 // pred_check
          %p376 = pneg %p184
        $region38: #{tpu_custom_call.1} parent=15 // pred_check_branch
          %378 = sbr.rel (%p376) target = $region40
        $region39: #{tpu_custom_call.1} parent=15 // pred_region
          %p379 = scmp.lt.s32.totalorder %s30, 1
          %s380 = scalar_select %p379, %s30, 1
          %s381 = smul.addr %s380, 4
          %s382 = smul.addr %s381, 4
          %s383 = scalar_lea.vmem %s5, %s382
        $region40: #{tpu_custom_call.1} parent=15 // pred_fallthru
          _
        // Predicated region
        $region41: #{tpu_custom_call.1} parent=15 // pred_check
          %p384 = pneg %p210
        $region42: #{tpu_custom_call.1} parent=15 // pred_check_branch
          %386 = sbr.rel (%p384) target = $region44
        $region43: #{tpu_custom_call.1} parent=15 // pred_region
          %s387 = sand.u32 %s200, 1
          %s388 = scalar_lea.sflag [#allocation4], %s387
          %s389 = sand.u32 %s200, 1
          %s390 = smul.addr %s389, 16
          %s391 = scalar_lea.vmem [#allocation3], %s390
          %s393 = ssub.s32 256, 256
          %394 = vsyncadd %s388, %s393
          %s395 = smul.addr %s30, 4
          %s396 = smul.addr %s395, 64
          %s397 = scalar_lea.hbm %s6, %s396
          %s398 = sshll.u32 %s391, 4
          %s399 = int_to_ptr.vmem [resolvable:$true] %s398
          %404 = dma.hbm_to_vmem [thread:$0]  %s397, 256, %s399, %s388, 64, 64, 4
        $region44: #{tpu_custom_call.1} parent=15 // pred_fallthru
          _
        // Predicated region
        $region45: #{tpu_custom_call.1} parent=15 // pred_check
          %p405 = pneg %p236
        $region46: #{tpu_custom_call.1} parent=15 // pred_check_branch
          %407 = sbr.rel (%p405) target = $region48
        $region47: #{tpu_custom_call.1} parent=15 // pred_region
          %p408 = scmp.lt.s32.totalorder %s30, 1
          %s409 = scalar_select %p408, %s30, 1
          %s410 = smul.addr %s409, 8
          %s411 = smul.addr %s410, 4
          %s412 = scalar_lea.vmem %s7, %s411
        $region48: #{tpu_custom_call.1} parent=15 // pred_fallthru
          _
        // Predicated region
        $region49: #{tpu_custom_call.1} parent=15 // pred_check
          %p413 = pneg %p262
        $region50: #{tpu_custom_call.1} parent=15 // pred_check_branch
          %415 = sbr.rel (%p413) target = $region52
        $region51: #{tpu_custom_call.1} parent=15 // pred_region
          %p416 = scmp.lt.s32.totalorder %s30, 1
          %s417 = scalar_select %p416, %s30, 1
          %s418 = scalar_lea.vmem %s8, %s417
        $region52: #{tpu_custom_call.1} parent=15 // pred_fallthru
          _
        // Predicated region
        $region53: #{tpu_custom_call.1} parent=15 // pred_check
          %p419 = pneg %p288
        $region54: #{tpu_custom_call.1} parent=15 // pred_check_branch
          %421 = sbr.rel (%p419) target = $region56
        $region55: #{tpu_custom_call.1} parent=15 // pred_region
          %p422 = scmp.lt.s32.totalorder %s30, 1
          %s423 = scalar_select %p422, %s30, 1
          %s424 = smul.addr %s423, 2
          %s425 = smul.addr %s424, 8
          %s426 = scalar_lea.vmem %s9, %s425
        $region56: #{tpu_custom_call.1} parent=15 // pred_fallthru
          _
      $region16: #{tpu_custom_call.1} parent=5 // pred_fallthru
        _
      %p427 = scmp.le.s32.totalorder 1, %s22
      %p428 = scmp.lt.s32.totalorder %s22, 5
      %p429 = pnand %p427, %p428
      %p430 = pneg %p429
      // Predicated region
      $region57: #{tpu_custom_call.1} parent=5 // pred_check
        _
      $region58: #{tpu_custom_call.1} parent=5 // pred_check_branch
        %432 = sbr.rel (%p429) target = $region60
      $region59: #{tpu_custom_call.1} parent=5 // pred_region
        %s433 = ssub.s32 %s22, 1
        %s434 = sand.u32 %s203, 1
        %s435 = scalar_lea.sflag [#allocation4], %s434
        %s436 = sand.u32 %s203, 1
        %s437 = smul.addr %s436, 16
        %s438 = scalar_lea.vmem [#allocation3], %s437
        // Predicated region
        $region61: #{tpu_custom_call.1} parent=59 // pred_check
          %p439 = pneg %p216
        $region62: #{tpu_custom_call.1} parent=59 // pred_check_branch
          %441 = sbr.rel (%p439) target = $region64
        $region63: #{tpu_custom_call.1} parent=59 // pred_region
          %442 = dma.done %s435, 256
        $region64: #{tpu_custom_call.1} parent=59 // pred_fallthru
          _
        %p443 = scmp.lt.s32.totalorder %s31, 1
        %s444 = scalar_select %p443, %s31, 1
        %s445 = smul.addr %s444, 8
        %s446 = scalar_lea.vmem %s0, %s445
        %p447 = pneg %p60
        %p448 = pneg %p57
        %p449 = scmp.lt.s32.totalorder %s31, 1
        %s450 = scalar_select %p449, %s31, 1
        %s451 = scalar_lea.vmem %s1, %s450
        %p452 = pneg %p86
        %p453 = pneg %p83
        %p454 = scmp.lt.s32.totalorder %s32, 1
        %s455 = scalar_select %p454, %s32, 1
        %s456 = smul.addr %s455, 4
        %s457 = smul.addr %s456, 4
        %s458 = scalar_lea.vmem %s2, %s457
        %p459 = pneg %p112
        %p460 = pneg %p109
        %p461 = scmp.lt.s32.totalorder %s32, 1
        %s462 = scalar_select %p461, %s32, 1
        %s463 = smul.addr %s462, 4
        %s464 = smul.addr %s463, 4
        %s465 = scalar_lea.vmem %s3, %s464
        %p466 = pneg %p138
        %p467 = pneg %p135
        %p468 = scmp.lt.s32.totalorder %s32, 1
        %s469 = scalar_select %p468, %s32, 1
        %s470 = smul.addr %s469, 4
        %s471 = smul.addr %s470, 4
        %s472 = scalar_lea.vmem %s4, %s471
        %p473 = pneg %p164
        %p474 = pneg %p161
        %p475 = scmp.lt.s32.totalorder %s32, 1
        %s476 = scalar_select %p475, %s32, 1
        %s477 = smul.addr %s476, 4
        %s478 = smul.addr %s477, 4
        %s479 = scalar_lea.vmem %s5, %s478
        %p480 = pneg %p190
        %p481 = pneg %p187
        %s482 = sand.u32 %s203, 1
        %s483 = scalar_lea.sflag [#allocation4], %s482
        %s484 = sand.u32 %s203, 1
        %s485 = smul.addr %s484, 16
        %s486 = scalar_lea.vmem [#allocation3], %s485
        %p487 = pneg %p216
        %p488 = pneg %p213
        %p489 = scmp.lt.s32.totalorder %s32, 1
        %s490 = scalar_select %p489, %s32, 1
        %s491 = smul.addr %s490, 8
        %s492 = smul.addr %s491, 4
        %s493 = scalar_lea.vmem %s7, %s492
        %p494 = pneg %p242
        %p495 = pneg %p239
        %p496 = scmp.lt.s32.totalorder %s32, 1
        %s497 = scalar_select %p496, %s32, 1
        %s498 = scalar_lea.vmem %s8, %s497
        %p499 = pneg %p268
        %p500 = pneg %p265
        %p501 = scmp.lt.s32.totalorder %s32, 1
        %s502 = scalar_select %p501, %s32, 1
        %s503 = smul.addr %s502, 2
        %s504 = smul.addr %s503, 8
        %s505 = scalar_lea.vmem %s9, %s504
        %p506 = pneg %p294
        %p507 = pneg %p291
        %p508 = pneg %p320
        %p509 = pneg %p317
        %s510 = sand.u32 %s307, 1
        %s511 = scalar_lea.sflag [#allocation5], %s510
        %s512 = sand.u32 %s307, 1
        %s513 = smul.addr %s512, 8
        %s514 = scalar_lea.vmem [#allocation6], %s513
        %p515 = scmp.lt.s32.totalorder %s31, 1
        %s516 = scalar_select %p515, %s31, 1
        %s517 = smul.addr %s516, 8
        %s518 = scalar_lea.vmem %s0, %s517
        %p519 = scmp.lt.s32.totalorder %s31, 1
        %s520 = scalar_select %p519, %s31, 1
        %s521 = scalar_lea.vmem %s1, %s520
        %p522 = scmp.lt.s32.totalorder %s32, 1
        %s523 = scalar_select %p522, %s32, 1
        %s524 = smul.addr %s523, 4
        %s525 = smul.addr %s524, 4
        %s526 = scalar_lea.vmem %s2, %s525
        %p527 = scmp.lt.s32.totalorder %s32, 1
        %s528 = scalar_select %p527, %s32, 1
        %s529 = smul.addr %s528, 4
        %s530 = smul.addr %s529, 4
        %s531 = scalar_lea.vmem %s3, %s530
        %p532 = scmp.lt.s32.totalorder %s32, 1
        %s533 = scalar_select %p532, %s32, 1
        %s534 = smul.addr %s533, 4
        %s535 = smul.addr %s534, 4
        %s536 = scalar_lea.vmem %s4, %s535
        %p537 = scmp.lt.s32.totalorder %s32, 1
        %s538 = scalar_select %p537, %s32, 1
        %s539 = smul.addr %s538, 4
        %s540 = smul.addr %s539, 4
        %s541 = scalar_lea.vmem %s5, %s540
        %p542 = scmp.lt.s32.totalorder %s32, 1
        %s543 = scalar_select %p542, %s32, 1
        %s544 = smul.addr %s543, 8
        %s545 = smul.addr %s544, 4
        %s546 = scalar_lea.vmem %s7, %s545
        %p547 = scmp.lt.s32.totalorder %s32, 1
        %s548 = scalar_select %p547, %s32, 1
        %s549 = scalar_lea.vmem %s8, %s548
        %p550 = scmp.lt.s32.totalorder %s32, 1
        %s551 = scalar_select %p550, %s32, 1
        %s552 = smul.addr %s551, 2
        %s553 = smul.addr %s552, 8
        %s554 = scalar_lea.vmem %s9, %s553
        %p556 = scmp.eq.s32.totalorder %s32, 0
        // Predicated region
        $region65: #{tpu_custom_call.1} parent=59 // pred_check
          %p557 = pneg %p556
        $region66: #{tpu_custom_call.1} parent=59 // pred_check_branch
          %559 = sbr.rel (%p557) target = $region68
        $region67: #{tpu_custom_call.1} parent=59 // pred_region
          %v560 = vld [vmem:[%s518] sm:$0xff]
          %vm561 = vcmask 261120
          %562 = vst.msk [vmem:[#allocation2] sm:$0xff] %vm561, %v560
        $region68: #{tpu_custom_call.1} parent=59 // pred_fallthru
          _
        %v563 = vld [vmem:[#allocation2] sm:$0xff]
        %v564 = vld [vmem:[%s554] sm:$0xff]
        %v565 = vld [vmem:[%s554 + $0x8] sm:$0x1]
        %v566 = vld [vmem:[%s521] sm:$0x1]
        %v567 = vpack.c.bf16 %v563, %v563
        %v568 = vld [vmem:[%s526] sm:$0xf]
        %v569 = vld [vmem:[%s526 + $0x4] sm:$0xf]
        %v570 = vld [vmem:[%s526 + $0x8] sm:$0xf]
        %v571 = vld [vmem:[%s526 + $0xc] sm:$0xf]
        %v572 = vlaneseq
        %v573 = vshrl.u32 %v572, 7
        %v574 = vsub.s32 0, %v573
        %v575 = vrot.slane %v564, %v574
        %v580 = vunpack.c.l.b16 %v568
        %v581 = vunpack.c.l.b16 %v569
        %v582 = vunpack.c.l.b16 %v570
        %v583 = vunpack.c.l.b16 %v571
        %v584 = vpack.c.b16 %v581, %v580
        %v585 = vpack.c.b16 %v583, %v582
        %vm588 = vcmask 261120
        %v590 = vsel %vm588, %v567, 0
        %592 = vmatprep.subr.bf16.mxu0 0
        %593 = vmatpush1.bf16.msra.mxu0 0
        %594 = vmatprep.subr.bf16.mxu0 0
        %595 = vmatpush1.bf16.msra.mxu0 0
        %596 = vmatprep.subr.bf16.mxu0 0
        %597 = vmatpush1.bf16.msra.mxu0 0
        %598 = vmatprep.subr.bf16.mxu0 0
        %599 = vmatpush1.bf16.msra.mxu0 0
        %600 = vmatprep.subr.bf16.mxu0 0
        %601 = vmatpush1.bf16.msra.mxu0 0
        %602 = vmatprep.subr.bf16.mxu0 0
        %603 = vmatpush1.bf16.msra.mxu0 0
        %604 = vmatprep.subr.bf16.mxu0 0
        %605 = vmatpush1.bf16.msra.mxu0 %v585
        %606 = vmatprep.subr.bf16.mxu0 0
        %607 = vmatpush1.bf16.msra.mxu0 %v584
        %608 = vmatprep.subr.bf16.mxu0 0
        %609 = vmatpush2.bf16.msra.mxu0 0
        %610 = vmatprep.subr.bf16.mxu0 0
        %611 = vmatpush2.bf16.msra.mxu0 0
        %612 = vmatprep.subr.bf16.mxu0 0
        %613 = vmatpush2.bf16.msra.mxu0 0
        %614 = vmatprep.subr.bf16.mxu0 0
        %615 = vmatpush2.bf16.msra.mxu0 0
        %616 = vmatprep.subr.bf16.mxu0 0
        %617 = vmatpush2.bf16.msra.mxu0 0
        %618 = vmatprep.subr.bf16.mxu0 0
        %619 = vmatpush2.bf16.msra.mxu0 0
        %620 = vmatprep.subr.bf16.mxu0 0
        %621 = vmatpush2.bf16.msra.mxu0 0
        %622 = vmatprep.subr.bf16.mxu0 0
        %623 = vmatpush2.bf16.msra.mxu0 0
        %624 = vmatprep.mubr.bf16.mxu0 0
        %625 = vmatmul.mubr.bf16.gmra.mxu0 %v590
        %v626 = vpop.f32.mrf.mxu0
        %v627 = vadd.f32 %v575, %v626
        %v628 = vpop.f32.mrf.mxu0
        %v629 = vpop.f32.mrf.mxu0
        %v630 = vpop.f32.mrf.mxu0
        %631 = vdwg.mxu0
        %v632 = vld [vmem:[%s531] sm:$0xf]
        %v633 = vld [vmem:[%s531 + $0x4] sm:$0xf]
        %v634 = vld [vmem:[%s531 + $0x8] sm:$0xf]
        %v635 = vld [vmem:[%s531 + $0xc] sm:$0xf]
        %v636 = vlaneseq
        %v637 = vshrl.u32 %v636, 7
        %v638 = vsub.s32 1, %v637
        %v639 = vrot.slane %v564, %v638
        %v644 = vunpack.c.l.b16 %v632
        %v645 = vunpack.c.l.b16 %v633
        %v646 = vunpack.c.l.b16 %v634
        %v647 = vunpack.c.l.b16 %v635
        %v648 = vpack.c.b16 %v645, %v644
        %v649 = vpack.c.b16 %v647, %v646
        %652 = vmatprep.subr.bf16.mxu0 0
        %653 = vmatpush1.bf16.msra.mxu0 0
        %654 = vmatprep.subr.bf16.mxu0 0
        %655 = vmatpush1.bf16.msra.mxu0 0
        %656 = vmatprep.subr.bf16.mxu0 0
        %657 = vmatpush1.bf16.msra.mxu0 0
        %658 = vmatprep.subr.bf16.mxu0 0
        %659 = vmatpush1.bf16.msra.mxu0 0
        %660 = vmatprep.subr.bf16.mxu0 0
        %661 = vmatpush1.bf16.msra.mxu0 0
        %662 = vmatprep.subr.bf16.mxu0 0
        %663 = vmatpush1.bf16.msra.mxu0 0
        %664 = vmatprep.subr.bf16.mxu0 0
        %665 = vmatpush1.bf16.msra.mxu0 %v649
        %666 = vmatprep.subr.bf16.mxu0 0
        %667 = vmatpush1.bf16.msra.mxu0 %v648
        %668 = vmatprep.subr.bf16.mxu0 0
        %669 = vmatpush2.bf16.msra.mxu0 0
        %670 = vmatprep.subr.bf16.mxu0 0
        %671 = vmatpush2.bf16.msra.mxu0 0
        %672 = vmatprep.subr.bf16.mxu0 0
        %673 = vmatpush2.bf16.msra.mxu0 0
        %674 = vmatprep.subr.bf16.mxu0 0
        %675 = vmatpush2.bf16.msra.mxu0 0
        %676 = vmatprep.subr.bf16.mxu0 0
        %677 = vmatpush2.bf16.msra.mxu0 0
        %678 = vmatprep.subr.bf16.mxu0 0
        %679 = vmatpush2.bf16.msra.mxu0 0
        %680 = vmatprep.subr.bf16.mxu0 0
        %681 = vmatpush2.bf16.msra.mxu0 0
        %682 = vmatprep.subr.bf16.mxu0 0
        %683 = vmatpush2.bf16.msra.mxu0 0
        %684 = vmatprep.mubr.bf16.mxu0 0
        %685 = vmatmul.mubr.bf16.gmra.mxu0 %v590
        %v686 = vpop.f32.mrf.mxu0
        %v687 = vadd.f32 %v639, %v686
        %v688 = vpop.f32.mrf.mxu0
        %v689 = vpop.f32.mrf.mxu0
        %v690 = vpop.f32.mrf.mxu0
        %691 = vdwg.mxu0
        %v692 = vld [vmem:[%s536] sm:$0xf]
        %v693 = vld [vmem:[%s536 + $0x4] sm:$0xf]
        %v694 = vld [vmem:[%s536 + $0x8] sm:$0xf]
        %v695 = vld [vmem:[%s536 + $0xc] sm:$0xf]
        %v696 = vlaneseq
        %v697 = vshrl.u32 %v696, 7
        %v698 = vsub.s32 2, %v697
        %v699 = vrot.slane %v564, %v698
        %v704 = vunpack.c.l.b16 %v692
        %v705 = vunpack.c.l.b16 %v693
        %v706 = vunpack.c.l.b16 %v694
        %v707 = vunpack.c.l.b16 %v695
        %v708 = vpack.c.b16 %v705, %v704
        %v709 = vpack.c.b16 %v707, %v706
        %712 = vmatprep.subr.bf16.mxu0 0
        %713 = vmatpush1.bf16.msra.mxu0 0
        %714 = vmatprep.subr.bf16.mxu0 0
        %715 = vmatpush1.bf16.msra.mxu0 0
        %716 = vmatprep.subr.bf16.mxu0 0
        %717 = vmatpush1.bf16.msra.mxu0 0
        %718 = vmatprep.subr.bf16.mxu0 0
        %719 = vmatpush1.bf16.msra.mxu0 0
        %720 = vmatprep.subr.bf16.mxu0 0
        %721 = vmatpush1.bf16.msra.mxu0 0
        %722 = vmatprep.subr.bf16.mxu0 0
        %723 = vmatpush1.bf16.msra.mxu0 0
        %724 = vmatprep.subr.bf16.mxu0 0
        %725 = vmatpush1.bf16.msra.mxu0 %v709
        %726 = vmatprep.subr.bf16.mxu0 0
        %727 = vmatpush1.bf16.msra.mxu0 %v708
        %728 = vmatprep.subr.bf16.mxu0 0
        %729 = vmatpush2.bf16.msra.mxu0 0
        %730 = vmatprep.subr.bf16.mxu0 0
        %731 = vmatpush2.bf16.msra.mxu0 0
        %732 = vmatprep.subr.bf16.mxu0 0
        %733 = vmatpush2.bf16.msra.mxu0 0
        %734 = vmatprep.subr.bf16.mxu0 0
        %735 = vmatpush2.bf16.msra.mxu0 0
        %736 = vmatprep.subr.bf16.mxu0 0
        %737 = vmatpush2.bf16.msra.mxu0 0
        %738 = vmatprep.subr.bf16.mxu0 0
        %739 = vmatpush2.bf16.msra.mxu0 0
        %740 = vmatprep.subr.bf16.mxu0 0
        %741 = vmatpush2.bf16.msra.mxu0 0
        %742 = vmatprep.subr.bf16.mxu0 0
        %743 = vmatpush2.bf16.msra.mxu0 0
        %744 = vmatprep.mubr.bf16.mxu0 0
        %745 = vmatmul.mubr.bf16.gmra.mxu0 %v590
        %v746 = vpop.f32.mrf.mxu0
        %v747 = vadd.f32 %v699, %v746
        %v748 = vpop.f32.mrf.mxu0
        %v749 = vpop.f32.mrf.mxu0
        %v750 = vpop.f32.mrf.mxu0
        %751 = vdwg.mxu0
        %v752 = vpack.c.bf16 %v627, %v627
        %v753 = vpack.c.bf16 %v687, %v687
        %v754 = vpack.c.bf16 %v747, %v747
        %v756 = vlaneseq
        %v757 = vshrl.u32 %v756, 7
        %v758 = vsub.s32 0, %v757
        %v759 = vrot.slane %v566, %v758
        %vm761 = vcmask 64512
        %v763 = vsel %vm761, %v752, 0
        %v766 = vsel %vm761, %v753, 0
        %768 = vmatprep.subr.bf16.mxu0 0
        %769 = vmatpush1.bf16.xpose.msra.mxu0 0
        %770 = vmatprep.subr.bf16.mxu0 0
        %771 = vmatpush1.bf16.xpose.msra.mxu0 0
        %772 = vmatprep.subr.bf16.mxu0 0
        %773 = vmatpush1.bf16.xpose.msra.mxu0 0
        %774 = vmatprep.subr.bf16.mxu0 0
        %775 = vmatpush1.bf16.xpose.msra.mxu0 0
        %776 = vmatprep.subr.bf16.mxu0 0
        %777 = vmatpush1.bf16.xpose.msra.mxu0 0
        %778 = vmatprep.subr.bf16.mxu0 0
        %779 = vmatpush1.bf16.xpose.msra.mxu0 0
        %780 = vmatprep.subr.bf16.mxu0 0
        %781 = vmatpush1.bf16.xpose.msra.mxu0 0
        %782 = vmatprep.subr.bf16.mxu0 0
        %783 = vmatpush1.bf16.xpose.msra.mxu0 %v766
        %784 = vmatprep.subr.bf16.mxu0 0
        %785 = vmatpush2.bf16.xpose.msra.mxu0 0
        %786 = vmatprep.subr.bf16.mxu0 0
        %787 = vmatpush2.bf16.xpose.msra.mxu0 0
        %788 = vmatprep.subr.bf16.mxu0 0
        %789 = vmatpush2.bf16.xpose.msra.mxu0 0
        %790 = vmatprep.subr.bf16.mxu0 0
        %791 = vmatpush2.bf16.xpose.msra.mxu0 0
        %792 = vmatprep.subr.bf16.mxu0 0
        %793 = vmatpush2.bf16.xpose.msra.mxu0 0
        %794 = vmatprep.subr.bf16.mxu0 0
        %795 = vmatpush2.bf16.xpose.msra.mxu0 0
        %796 = vmatprep.subr.bf16.mxu0 0
        %797 = vmatpush2.bf16.xpose.msra.mxu0 0
        %798 = vmatprep.subr.bf16.mxu0 0
        %799 = vmatpush2.bf16.xpose.msra.mxu0 0
        %800 = vmatprep.mubr.bf16.mxu0 0
        %801 = vmatmul.mubr.bf16.gmra.mxu0 %v763
        %v802 = vpop.f32.mrf.mxu0
        %v803 = vadd.f32 %v759, %v802
        %v804 = vpop.f32.mrf.mxu0
        %v805 = vpop.f32.mrf.mxu0
        %v806 = vpop.f32.mrf.mxu0
        %807 = vdwg.mxu0
        %v808 = vsel %vm761, %v803, -inf
        %809 = vmax.xlane.f32.xlu0 %v808
        %v810 = vpop.xlane.xlu0 %809
        %v811 = vsub.f32 %v803, %v810
        %v812 = vmul.f32 %v811, 1.442695
        %v813 = vpow.pop %v812
        %v814 = vsel %vm761, %v813, 0.0
        %815 = vadd.xlane.f32.xlu0 %v814
        %v816 = vpop.xlane.xlu0 %815
        %v817 = vrcp.pop %v816
        %v818 = vmul.f32 %v813, %v817
        %v819 = vpack.c.bf16 %v818, %v818
        %v821 = vsel %vm761, %v819, 0
        %vm823 = vcmask 1043456
        %v825 = vsel %vm823, %v754, 0
        %827 = vmatprep.subr.bf16.mxu0 0
        %828 = vmatpush1.bf16.msra.mxu0 0
        %829 = vmatprep.subr.bf16.mxu0 0
        %830 = vmatpush1.bf16.msra.mxu0 0
        %831 = vmatprep.subr.bf16.mxu0 0
        %832 = vmatpush1.bf16.msra.mxu0 0
        %833 = vmatprep.subr.bf16.mxu0 0
        %834 = vmatpush1.bf16.msra.mxu0 0
        %835 = vmatprep.subr.bf16.mxu0 0
        %836 = vmatpush1.bf16.msra.mxu0 0
        %837 = vmatprep.subr.bf16.mxu0 0
        %838 = vmatpush1.bf16.msra.mxu0 0
        %839 = vmatprep.subr.bf16.mxu0 0
        %840 = vmatpush1.bf16.msra.mxu0 0
        %841 = vmatprep.subr.bf16.mxu0 0
        %842 = vmatpush1.bf16.msra.mxu0 %v825
        %843 = vmatprep.subr.bf16.mxu0 0
        %844 = vmatpush2.bf16.msra.mxu0 0
        %845 = vmatprep.subr.bf16.mxu0 0
        %846 = vmatpush2.bf16.msra.mxu0 0
        %847 = vmatprep.subr.bf16.mxu0 0
        %848 = vmatpush2.bf16.msra.mxu0 0
        %849 = vmatprep.subr.bf16.mxu0 0
        %850 = vmatpush2.bf16.msra.mxu0 0
        %851 = vmatprep.subr.bf16.mxu0 0
        %852 = vmatpush2.bf16.msra.mxu0 0
        %853 = vmatprep.subr.bf16.mxu0 0
        %854 = vmatpush2.bf16.msra.mxu0 0
        %855 = vmatprep.subr.bf16.mxu0 0
        %856 = vmatpush2.bf16.msra.mxu0 0
        %857 = vmatprep.subr.bf16.mxu0 0
        %858 = vmatpush2.bf16.msra.mxu0 0
        %859 = vmatprep.mubr.bf16.mxu0 0
        %860 = vmatmul.mubr.bf16.gmra.mxu0 %v821
        %v861 = vpop.f32.mrf.mxu0
        %v862 = vadd.f32 0.0, %v861
        %v863 = vpop.f32.mrf.mxu0
        %v864 = vpop.f32.mrf.mxu0
        %v865 = vpop.f32.mrf.mxu0
        %866 = vdwg.mxu0
        %868 = vrot.lane.b32.xlu0 %v752, 120
        %v869 = vpop.permute.xlu0 %868
        %871 = vrot.lane.b32.xlu0 %v753, 120
        %v872 = vpop.permute.xlu0 %871
        %v874 = vsel %vm761, %v869, 0
        %v877 = vsel %vm761, %v872, 0
        %879 = vmatprep.subr.bf16.mxu0 0
        %880 = vmatpush1.bf16.xpose.msra.mxu0 0
        %881 = vmatprep.subr.bf16.mxu0 0
        %882 = vmatpush1.bf16.xpose.msra.mxu0 0
        %883 = vmatprep.subr.bf16.mxu0 0
        %884 = vmatpush1.bf16.xpose.msra.mxu0 0
        %885 = vmatprep.subr.bf16.mxu0 0
        %886 = vmatpush1.bf16.xpose.msra.mxu0 0
        %887 = vmatprep.subr.bf16.mxu0 0
        %888 = vmatpush1.bf16.xpose.msra.mxu0 0
        %889 = vmatprep.subr.bf16.mxu0 0
        %890 = vmatpush1.bf16.xpose.msra.mxu0 0
        %891 = vmatprep.subr.bf16.mxu0 0
        %892 = vmatpush1.bf16.xpose.msra.mxu0 0
        %893 = vmatprep.subr.bf16.mxu0 0
        %894 = vmatpush1.bf16.xpose.msra.mxu0 %v877
        %895 = vmatprep.subr.bf16.mxu0 0
        %896 = vmatpush2.bf16.xpose.msra.mxu0 0
        %897 = vmatprep.subr.bf16.mxu0 0
        %898 = vmatpush2.bf16.xpose.msra.mxu0 0
        %899 = vmatprep.subr.bf16.mxu0 0
        %900 = vmatpush2.bf16.xpose.msra.mxu0 0
        %901 = vmatprep.subr.bf16.mxu0 0
        %902 = vmatpush2.bf16.xpose.msra.mxu0 0
        %903 = vmatprep.subr.bf16.mxu0 0
        %904 = vmatpush2.bf16.xpose.msra.mxu0 0
        %905 = vmatprep.subr.bf16.mxu0 0
        %906 = vmatpush2.bf16.xpose.msra.mxu0 0
        %907 = vmatprep.subr.bf16.mxu0 0
        %908 = vmatpush2.bf16.xpose.msra.mxu0 0
        %909 = vmatprep.subr.bf16.mxu0 0
        %910 = vmatpush2.bf16.xpose.msra.mxu0 0
        %911 = vmatprep.mubr.bf16.mxu0 0
        %912 = vmatmul.mubr.bf16.gmra.mxu0 %v874
        %v913 = vpop.f32.mrf.mxu0
        %v914 = vadd.f32 %v759, %v913
        %v915 = vpop.f32.mrf.mxu0
        %v916 = vpop.f32.mrf.mxu0
        %v917 = vpop.f32.mrf.mxu0
        %918 = vdwg.mxu0
        %v919 = vsel %vm761, %v914, -inf
        %920 = vmax.xlane.f32.xlu0 %v919
        %v921 = vpop.xlane.xlu0 %920
        %v922 = vsub.f32 %v914, %v921
        %v923 = vmul.f32 %v922, 1.442695
        %v924 = vpow.pop %v923
        %v925 = vsel %vm761, %v924, 0.0
        %926 = vadd.xlane.f32.xlu0 %v925
        %v927 = vpop.xlane.xlu0 %926
        %v928 = vrcp.pop %v927
        %v929 = vmul.f32 %v924, %v928
        %v930 = vpack.c.bf16 %v929, %v929
        %932 = vrot.lane.b32.xlu0 %v754, 120
        %v933 = vpop.permute.xlu0 %932
        %v935 = vsel %vm761, %v930, 0
        %v938 = vsel %vm823, %v933, 0
        %940 = vmatprep.subr.bf16.mxu0 0
        %941 = vmatpush1.bf16.msra.mxu0 0
        %942 = vmatprep.subr.bf16.mxu0 0
        %943 = vmatpush1.bf16.msra.mxu0 0
        %944 = vmatprep.subr.bf16.mxu0 0
        %945 = vmatpush1.bf16.msra.mxu0 0
        %946 = vmatprep.subr.bf16.mxu0 0
        %947 = vmatpush1.bf16.msra.mxu0 0
        %948 = vmatprep.subr.bf16.mxu0 0
        %949 = vmatpush1.bf16.msra.mxu0 0
        %950 = vmatprep.subr.bf16.mxu0 0
        %951 = vmatpush1.bf16.msra.mxu0 0
        %952 = vmatprep.subr.bf16.mxu0 0
        %953 = vmatpush1.bf16.msra.mxu0 0
        %954 = vmatprep.subr.bf16.mxu0 0
        %955 = vmatpush1.bf16.msra.mxu0 %v938
        %956 = vmatprep.subr.bf16.mxu0 0
        %957 = vmatpush2.bf16.msra.mxu0 0
        %958 = vmatprep.subr.bf16.mxu0 0
        %959 = vmatpush2.bf16.msra.mxu0 0
        %960 = vmatprep.subr.bf16.mxu0 0
        %961 = vmatpush2.bf16.msra.mxu0 0
        %962 = vmatprep.subr.bf16.mxu0 0
        %963 = vmatpush2.bf16.msra.mxu0 0
        %964 = vmatprep.subr.bf16.mxu0 0
        %965 = vmatpush2.bf16.msra.mxu0 0
        %966 = vmatprep.subr.bf16.mxu0 0
        %967 = vmatpush2.bf16.msra.mxu0 0
        %968 = vmatprep.subr.bf16.mxu0 0
        %969 = vmatpush2.bf16.msra.mxu0 0
        %970 = vmatprep.subr.bf16.mxu0 0
        %971 = vmatpush2.bf16.msra.mxu0 0
        %972 = vmatprep.mubr.bf16.mxu0 0
        %973 = vmatmul.mubr.bf16.gmra.mxu0 %v935
        %v974 = vpop.f32.mrf.mxu0
        %v975 = vadd.f32 0.0, %v974
        %v976 = vpop.f32.mrf.mxu0
        %v977 = vpop.f32.mrf.mxu0
        %v978 = vpop.f32.mrf.mxu0
        %979 = vdwg.mxu0
        %980 = vrot.lane.b32.xlu0 %v752, 112
        %v981 = vpop.permute.xlu0 %980
        %982 = vrot.lane.b32.xlu0 %v753, 112
        %v983 = vpop.permute.xlu0 %982
        %v985 = vsel %vm761, %v981, 0
        %v988 = vsel %vm761, %v983, 0
        %990 = vmatprep.subr.bf16.mxu0 0
        %991 = vmatpush1.bf16.xpose.msra.mxu0 0
        %992 = vmatprep.subr.bf16.mxu0 0
        %993 = vmatpush1.bf16.xpose.msra.mxu0 0
        %994 = vmatprep.subr.bf16.mxu0 0
        %995 = vmatpush1.bf16.xpose.msra.mxu0 0
        %996 = vmatprep.subr.bf16.mxu0 0
        %997 = vmatpush1.bf16.xpose.msra.mxu0 0
        %998 = vmatprep.subr.bf16.mxu0 0
        %999 = vmatpush1.bf16.xpose.msra.mxu0 0
        %1000 = vmatprep.subr.bf16.mxu0 0
        %1001 = vmatpush1.bf16.xpose.msra.mxu0 0
        %1002 = vmatprep.subr.bf16.mxu0 0
        %1003 = vmatpush1.bf16.xpose.msra.mxu0 0
        %1004 = vmatprep.subr.bf16.mxu0 0
        %1005 = vmatpush1.bf16.xpose.msra.mxu0 %v988
        %1006 = vmatprep.subr.bf16.mxu0 0
        %1007 = vmatpush2.bf16.xpose.msra.mxu0 0
        %1008 = vmatprep.subr.bf16.mxu0 0
        %1009 = vmatpush2.bf16.xpose.msra.mxu0 0
        %1010 = vmatprep.subr.bf16.mxu0 0
        %1011 = vmatpush2.bf16.xpose.msra.mxu0 0
        %1012 = vmatprep.subr.bf16.mxu0 0
        %1013 = vmatpush2.bf16.xpose.msra.mxu0 0
        %1014 = vmatprep.subr.bf16.mxu0 0
        %1015 = vmatpush2.bf16.xpose.msra.mxu0 0
        %1016 = vmatprep.subr.bf16.mxu0 0
        %1017 = vmatpush2.bf16.xpose.msra.mxu0 0
        %1018 = vmatprep.subr.bf16.mxu0 0
        %1019 = vmatpush2.bf16.xpose.msra.mxu0 0
        %1020 = vmatprep.subr.bf16.mxu0 0
        %1021 = vmatpush2.bf16.xpose.msra.mxu0 0
        %1022 = vmatprep.mubr.bf16.mxu0 0
        %1023 = vmatmul.mubr.bf16.gmra.mxu0 %v985
        %v1024 = vpop.f32.mrf.mxu0
        %v1025 = vadd.f32 %v759, %v1024
        %v1026 = vpop.f32.mrf.mxu0
        %v1027 = vpop.f32.mrf.mxu0
        %v1028 = vpop.f32.mrf.mxu0
        %1029 = vdwg.mxu0
        %v1030 = vsel %vm761, %v1025, -inf
        %1031 = vmax.xlane.f32.xlu0 %v1030
        %v1032 = vpop.xlane.xlu0 %1031
        %v1033 = vsub.f32 %v1025, %v1032
        %v1034 = vmul.f32 %v1033, 1.442695
        %v1035 = vpow.pop %v1034
        %v1036 = vsel %vm761, %v1035, 0.0
        %1037 = vadd.xlane.f32.xlu0 %v1036
        %v1038 = vpop.xlane.xlu0 %1037
        %v1039 = vrcp.pop %v1038
        %v1040 = vmul.f32 %v1035, %v1039
        %v1041 = vpack.c.bf16 %v1040, %v1040
        %1042 = vrot.lane.b32.xlu0 %v754, 112
        %v1043 = vpop.permute.xlu0 %1042
        %v1045 = vsel %vm761, %v1041, 0
        %v1048 = vsel %vm823, %v1043, 0
        %1050 = vmatprep.subr.bf16.mxu0 0
        %1051 = vmatpush1.bf16.msra.mxu0 0
        %1052 = vmatprep.subr.bf16.mxu0 0
        %1053 = vmatpush1.bf16.msra.mxu0 0
        %1054 = vmatprep.subr.bf16.mxu0 0
        %1055 = vmatpush1.bf16.msra.mxu0 0
        %1056 = vmatprep.subr.bf16.mxu0 0
        %1057 = vmatpush1.bf16.msra.mxu0 0
        %1058 = vmatprep.subr.bf16.mxu0 0
        %1059 = vmatpush1.bf16.msra.mxu0 0
        %1060 = vmatprep.subr.bf16.mxu0 0
        %1061 = vmatpush1.bf16.msra.mxu0 0
        %1062 = vmatprep.subr.bf16.mxu0 0
        %1063 = vmatpush1.bf16.msra.mxu0 0
        %1064 = vmatprep.subr.bf16.mxu0 0
        %1065 = vmatpush1.bf16.msra.mxu0 %v1048
        %1066 = vmatprep.subr.bf16.mxu0 0
        %1067 = vmatpush2.bf16.msra.mxu0 0
        %1068 = vmatprep.subr.bf16.mxu0 0
        %1069 = vmatpush2.bf16.msra.mxu0 0
        %1070 = vmatprep.subr.bf16.mxu0 0
        %1071 = vmatpush2.bf16.msra.mxu0 0
        %1072 = vmatprep.subr.bf16.mxu0 0
        %1073 = vmatpush2.bf16.msra.mxu0 0
        %1074 = vmatprep.subr.bf16.mxu0 0
        %1075 = vmatpush2.bf16.msra.mxu0 0
        %1076 = vmatprep.subr.bf16.mxu0 0
        %1077 = vmatpush2.bf16.msra.mxu0 0
        %1078 = vmatprep.subr.bf16.mxu0 0
        %1079 = vmatpush2.bf16.msra.mxu0 0
        %1080 = vmatprep.subr.bf16.mxu0 0
        %1081 = vmatpush2.bf16.msra.mxu0 0
        %1082 = vmatprep.mubr.bf16.mxu0 0
        %1083 = vmatmul.mubr.bf16.gmra.mxu0 %v1045
        %v1084 = vpop.f32.mrf.mxu0
        %v1085 = vadd.f32 0.0, %v1084
        %v1086 = vpop.f32.mrf.mxu0
        %v1087 = vpop.f32.mrf.mxu0
        %v1088 = vpop.f32.mrf.mxu0
        %1089 = vdwg.mxu0
        %1090 = vrot.lane.b32.xlu0 %v752, 104
        %v1091 = vpop.permute.xlu0 %1090
        %1092 = vrot.lane.b32.xlu0 %v753, 104
        %v1093 = vpop.permute.xlu0 %1092
        %v1095 = vsel %vm761, %v1091, 0
        %v1098 = vsel %vm761, %v1093, 0
        %1100 = vmatprep.subr.bf16.mxu0 0
        %1101 = vmatpush1.bf16.xpose.msra.mxu0 0
        %1102 = vmatprep.subr.bf16.mxu0 0
        %1103 = vmatpush1.bf16.xpose.msra.mxu0 0
        %1104 = vmatprep.subr.bf16.mxu0 0
        %1105 = vmatpush1.bf16.xpose.msra.mxu0 0
        %1106 = vmatprep.subr.bf16.mxu0 0
        %1107 = vmatpush1.bf16.xpose.msra.mxu0 0
        %1108 = vmatprep.subr.bf16.mxu0 0
        %1109 = vmatpush1.bf16.xpose.msra.mxu0 0
        %1110 = vmatprep.subr.bf16.mxu0 0
        %1111 = vmatpush1.bf16.xpose.msra.mxu0 0
        %1112 = vmatprep.subr.bf16.mxu0 0
        %1113 = vmatpush1.bf16.xpose.msra.mxu0 0
        %1114 = vmatprep.subr.bf16.mxu0 0
        %1115 = vmatpush1.bf16.xpose.msra.mxu0 %v1098
        %1116 = vmatprep.subr.bf16.mxu0 0
        %1117 = vmatpush2.bf16.xpose.msra.mxu0 0
        %1118 = vmatprep.subr.bf16.mxu0 0
        %1119 = vmatpush2.bf16.xpose.msra.mxu0 0
        %1120 = vmatprep.subr.bf16.mxu0 0
        %1121 = vmatpush2.bf16.xpose.msra.mxu0 0
        %1122 = vmatprep.subr.bf16.mxu0 0
        %1123 = vmatpush2.bf16.xpose.msra.mxu0 0
        %1124 = vmatprep.subr.bf16.mxu0 0
        %1125 = vmatpush2.bf16.xpose.msra.mxu0 0
        %1126 = vmatprep.subr.bf16.mxu0 0
        %1127 = vmatpush2.bf16.xpose.msra.mxu0 0
        %1128 = vmatprep.subr.bf16.mxu0 0
        %1129 = vmatpush2.bf16.xpose.msra.mxu0 0
        %1130 = vmatprep.subr.bf16.mxu0 0
        %1131 = vmatpush2.bf16.xpose.msra.mxu0 0
        %1132 = vmatprep.mubr.bf16.mxu0 0
        %1133 = vmatmul.mubr.bf16.gmra.mxu0 %v1095
        %v1134 = vpop.f32.mrf.mxu0
        %v1135 = vadd.f32 %v759, %v1134
        %v1136 = vpop.f32.mrf.mxu0
        %v1137 = vpop.f32.mrf.mxu0
        %v1138 = vpop.f32.mrf.mxu0
        %1139 = vdwg.mxu0
        %v1140 = vsel %vm761, %v1135, -inf
        %1141 = vmax.xlane.f32.xlu0 %v1140
        %v1142 = vpop.xlane.xlu0 %1141
        %v1143 = vsub.f32 %v1135, %v1142
        %v1144 = vmul.f32 %v1143, 1.442695
        %v1145 = vpow.pop %v1144
        %v1146 = vsel %vm761, %v1145, 0.0
        %1147 = vadd.xlane.f32.xlu0 %v1146
        %v1148 = vpop.xlane.xlu0 %1147
        %v1149 = vrcp.pop %v1148
        %v1150 = vmul.f32 %v1145, %v1149
        %v1151 = vpack.c.bf16 %v1150, %v1150
        %1152 = vrot.lane.b32.xlu0 %v754, 104
        %v1153 = vpop.permute.xlu0 %1152
        %v1155 = vsel %vm761, %v1151, 0
        %v1158 = vsel %vm823, %v1153, 0
        %1160 = vmatprep.subr.bf16.mxu0 0
        %1161 = vmatpush1.bf16.msra.mxu0 0
        %1162 = vmatprep.subr.bf16.mxu0 0
        %1163 = vmatpush1.bf16.msra.mxu0 0
        %1164 = vmatprep.subr.bf16.mxu0 0
        %1165 = vmatpush1.bf16.msra.mxu0 0
        %1166 = vmatprep.subr.bf16.mxu0 0
        %1167 = vmatpush1.bf16.msra.mxu0 0
        %1168 = vmatprep.subr.bf16.mxu0 0
        %1169 = vmatpush1.bf16.msra.mxu0 0
        %1170 = vmatprep.subr.bf16.mxu0 0
        %1171 = vmatpush1.bf16.msra.mxu0 0
        %1172 = vmatprep.subr.bf16.mxu0 0
        %1173 = vmatpush1.bf16.msra.mxu0 0
        %1174 = vmatprep.subr.bf16.mxu0 0
        %1175 = vmatpush1.bf16.msra.mxu0 %v1158
        %1176 = vmatprep.subr.bf16.mxu0 0
        %1177 = vmatpush2.bf16.msra.mxu0 0
        %1178 = vmatprep.subr.bf16.mxu0 0
        %1179 = vmatpush2.bf16.msra.mxu0 0
        %1180 = vmatprep.subr.bf16.mxu0 0
        %1181 = vmatpush2.bf16.msra.mxu0 0
        %1182 = vmatprep.subr.bf16.mxu0 0
        %1183 = vmatpush2.bf16.msra.mxu0 0
        %1184 = vmatprep.subr.bf16.mxu0 0
        %1185 = vmatpush2.bf16.msra.mxu0 0
        %1186 = vmatprep.subr.bf16.mxu0 0
        %1187 = vmatpush2.bf16.msra.mxu0 0
        %1188 = vmatprep.subr.bf16.mxu0 0
        %1189 = vmatpush2.bf16.msra.mxu0 0
        %1190 = vmatprep.subr.bf16.mxu0 0
        %1191 = vmatpush2.bf16.msra.mxu0 0
        %1192 = vmatprep.mubr.bf16.mxu0 0
        %1193 = vmatmul.mubr.bf16.gmra.mxu0 %v1155
        %v1194 = vpop.f32.mrf.mxu0
        %v1195 = vadd.f32 0.0, %v1194
        %v1196 = vpop.f32.mrf.mxu0
        %v1197 = vpop.f32.mrf.mxu0
        %v1198 = vpop.f32.mrf.mxu0
        %1199 = vdwg.mxu0
        %1201 = vrot.lane.b32.xlu0 %v975, 8
        %v1202 = vpop.permute.xlu0 %1201
        %1205 = vrot.lane.b32.xlu0 %v1085, 16
        %v1206 = vpop.permute.xlu0 %1205
        %1209 = vrot.lane.b32.xlu0 %v1195, 24
        %v1210 = vpop.permute.xlu0 %1209
        %v1212 = vsel %vm761, %v862, %v1202
        %vm1213 = vcmask 130048
        %v1214 = vsel %vm1213, %v1212, %v1206
        %vm1215 = vcmask 195584
        %v1216 = vsel %vm1215, %v1214, %v1210
        %v1217 = vpack.c.bf16 %v1216, %v1216
        %v1218 = vld [vmem:[%s541] sm:$0xf]
        %v1219 = vld [vmem:[%s541 + $0x4] sm:$0xf]
        %v1220 = vld [vmem:[%s541 + $0x8] sm:$0xf]
        %v1221 = vld [vmem:[%s541 + $0xc] sm:$0xf]
        %v1222 = vlaneseq
        %v1223 = vshrl.u32 %v1222, 7
        %v1224 = vsub.s32 3, %v1223
        %v1225 = vrot.slane %v564, %v1224
        %v1230 = vunpack.c.l.b16 %v1218
        %v1231 = vunpack.c.l.b16 %v1219
        %v1232 = vunpack.c.l.b16 %v1220
        %v1233 = vunpack.c.l.b16 %v1221
        %v1234 = vpack.c.b16 %v1231, %v1230
        %v1235 = vpack.c.b16 %v1233, %v1232
        %v1239 = vsel %vm588, %v1217, 0
        %1241 = vmatprep.subr.bf16.mxu0 0
        %1242 = vmatpush1.bf16.msra.mxu0 0
        %1243 = vmatprep.subr.bf16.mxu0 0
        %1244 = vmatpush1.bf16.msra.mxu0 0
        %1245 = vmatprep.subr.bf16.mxu0 0
        %1246 = vmatpush1.bf16.msra.mxu0 0
        %1247 = vmatprep.subr.bf16.mxu0 0
        %1248 = vmatpush1.bf16.msra.mxu0 0
        %1249 = vmatprep.subr.bf16.mxu0 0
        %1250 = vmatpush1.bf16.msra.mxu0 0
        %1251 = vmatprep.subr.bf16.mxu0 0
        %1252 = vmatpush1.bf16.msra.mxu0 0
        %1253 = vmatprep.subr.bf16.mxu0 0
        %1254 = vmatpush1.bf16.msra.mxu0 %v1235
        %1255 = vmatprep.subr.bf16.mxu0 0
        %1256 = vmatpush1.bf16.msra.mxu0 %v1234
        %1257 = vmatprep.subr.bf16.mxu0 0
        %1258 = vmatpush2.bf16.msra.mxu0 0
        %1259 = vmatprep.subr.bf16.mxu0 0
        %1260 = vmatpush2.bf16.msra.mxu0 0
        %1261 = vmatprep.subr.bf16.mxu0 0
        %1262 = vmatpush2.bf16.msra.mxu0 0
        %1263 = vmatprep.subr.bf16.mxu0 0
        %1264 = vmatpush2.bf16.msra.mxu0 0
        %1265 = vmatprep.subr.bf16.mxu0 0
        %1266 = vmatpush2.bf16.msra.mxu0 0
        %1267 = vmatprep.subr.bf16.mxu0 0
        %1268 = vmatpush2.bf16.msra.mxu0 0
        %1269 = vmatprep.subr.bf16.mxu0 0
        %1270 = vmatpush2.bf16.msra.mxu0 0
        %1271 = vmatprep.subr.bf16.mxu0 0
        %1272 = vmatpush2.bf16.msra.mxu0 0
        %1273 = vmatprep.mubr.bf16.mxu0 0
        %1274 = vmatmul.mubr.bf16.gmra.mxu0 %v1239
        %v1275 = vpop.f32.mrf.mxu0
        %v1276 = vadd.f32 %v1225, %v1275
        %v1277 = vpop.f32.mrf.mxu0
        %v1278 = vpop.f32.mrf.mxu0
        %v1279 = vpop.f32.mrf.mxu0
        %1280 = vdwg.mxu0
        %v1281 = vadd.f32 %v563, %v1276
        %v1282 = vsel %vm588, %v1281, 0.0
        %1283 = vadd.xlane.f32.xlu0 %v1282
        %v1284 = vpop.xlane.xlu0 %1283
        %v1285 = vrcp.pop 32.0
        %v1286 = vmul.f32 %v1284, %v1285
        %v1287 = vsub.f32 %v1281, %v1286
        %v1288 = vmul.f32 %v1287, %v1287
        %v1289 = vsel %vm588, %v1288, 0.0
        %1290 = vadd.xlane.f32.xlu0 %v1289
        %v1291 = vpop.xlane.xlu0 %1290
        %v1292 = vmul.f32 %v1291, %v1285
        %v1293 = vlaneseq
        %v1294 = vshrl.u32 %v1293, 7
        %v1295 = vsub.s32 5, %v1294
        %v1296 = vrot.slane %v564, %v1295
        %v1297 = vmul.f32 %v1296, %v1287
        %v1298 = vadd.f32 %v1292, 1e-12
        %v1299 = vrsqrt.pop %v1298
        %v1300 = vmul.f32 %v1297, %v1299
        %v1301 = vlaneseq
        %v1302 = vshrl.u32 %v1301, 7
        %v1303 = vsub.s32 6, %v1302
        %v1304 = vrot.slane %v564, %v1303
        %v1305 = vadd.f32 %v1300, %v1304
        %v1306 = vpack.c.bf16 %v1305, %v1305
        %v1307 = vld [vmem:[%s438] sm:$0xf]
        %v1308 = vld [vmem:[%s438 + $0x4] sm:$0xf]
        %v1309 = vld [vmem:[%s438 + $0x8] sm:$0xf]
        %v1310 = vld [vmem:[%s438 + $0xc] sm:$0xf]
        %v1311 = vld [vmem:[%s549] sm:$0x1]
        %v1313 = vlaneseq
        %v1314 = vshrl.u32 %v1313, 7
        %v1315 = vsub.s32 0, %v1314
        %v1316 = vrot.slane %v1311, %v1315
        %v1322 = vunpack.c.l.b16 %v1307
        %v1323 = vunpack.c.l.b16 %v1308
        %v1324 = vunpack.c.l.b16 %v1309
        %v1325 = vunpack.c.l.b16 %v1310
        %v1326 = vpack.c.b16 %v1323, %v1322
        %v1327 = vpack.c.b16 %v1325, %v1324
        %v1331 = vsel %vm588, %v1306, 0
        %1333 = vmatprep.subr.bf16.mxu0 0
        %1334 = vmatpush1.bf16.msra.mxu0 0
        %1335 = vmatprep.subr.bf16.mxu0 0
        %1336 = vmatpush1.bf16.msra.mxu0 0
        %1337 = vmatprep.subr.bf16.mxu0 0
        %1338 = vmatpush1.bf16.msra.mxu0 0
        %1339 = vmatprep.subr.bf16.mxu0 0
        %1340 = vmatpush1.bf16.msra.mxu0 0
        %1341 = vmatprep.subr.bf16.mxu0 0
        %1342 = vmatpush1.bf16.msra.mxu0 0
        %1343 = vmatprep.subr.bf16.mxu0 0
        %1344 = vmatpush1.bf16.msra.mxu0 0
        %1345 = vmatprep.subr.bf16.mxu0 0
        %1346 = vmatpush1.bf16.msra.mxu0 %v1327
        %1347 = vmatprep.subr.bf16.mxu0 0
        %1348 = vmatpush1.bf16.msra.mxu0 %v1326
        %1349 = vmatprep.subr.bf16.mxu0 0
        %1350 = vmatpush2.bf16.msra.mxu0 0
        %1351 = vmatprep.subr.bf16.mxu0 0
        %1352 = vmatpush2.bf16.msra.mxu0 0
        %1353 = vmatprep.subr.bf16.mxu0 0
        %1354 = vmatpush2.bf16.msra.mxu0 0
        %1355 = vmatprep.subr.bf16.mxu0 0
        %1356 = vmatpush2.bf16.msra.mxu0 0
        %1357 = vmatprep.subr.bf16.mxu0 0
        %1358 = vmatpush2.bf16.msra.mxu0 0
        %1359 = vmatprep.subr.bf16.mxu0 0
        %1360 = vmatpush2.bf16.msra.mxu0 0
        %1361 = vmatprep.subr.bf16.mxu0 0
        %1362 = vmatpush2.bf16.msra.mxu0 0
        %1363 = vmatprep.subr.bf16.mxu0 0
        %1364 = vmatpush2.bf16.msra.mxu0 0
        %1365 = vmatprep.mubr.bf16.mxu0 0
        %1366 = vmatmul.mubr.bf16.gmra.mxu0 %v1331
        %v1367 = vpop.f32.mrf.mxu0
        %v1368 = vadd.f32 %v1316, %v1367
        %v1369 = vpop.f32.mrf.mxu0
        %v1370 = vpop.f32.mrf.mxu0
        %v1371 = vpop.f32.mrf.mxu0
        %1372 = vdwg.mxu0
        %v1373 = vmul.f32 %v1368, 0.5
        %v1374 = vmul.f32 %v1368, 0.70710677
        %v1375 = verf.f32.pop %v1374
        %v1376 = vadd.f32 %v1375, 1.0
        %v1377 = vmul.f32 %v1373, %v1376
        %v1378 = vpack.c.bf16 %v1377, %v1377
        %v1379 = vld [vmem:[%s546] sm:$0xf]
        %v1380 = vld [vmem:[%s546 + $0x4] sm:$0xf]
        %v1381 = vld [vmem:[%s546 + $0x8] sm:$0xf]
        %v1382 = vld [vmem:[%s546 + $0xc] sm:$0xf]
        %v1383 = vld [vmem:[%s546 + $0x10] sm:$0xf]
        %v1384 = vld [vmem:[%s546 + $0x14] sm:$0xf]
        %v1385 = vld [vmem:[%s546 + $0x18] sm:$0xf]
        %v1386 = vld [vmem:[%s546 + $0x1c] sm:$0xf]
        %v1387 = vlaneseq
        %v1388 = vshrl.u32 %v1387, 7
        %v1389 = vsub.s32 4, %v1388
        %v1390 = vrot.slane %v564, %v1389
        %v1399 = vunpack.c.l.b16 %v1379
        %v1400 = vunpack.c.l.b16 %v1380
        %v1401 = vunpack.c.l.b16 %v1381
        %v1402 = vunpack.c.l.b16 %v1382
        %v1403 = vunpack.c.l.b16 %v1383
        %v1404 = vunpack.c.l.b16 %v1384
        %v1405 = vunpack.c.l.b16 %v1385
        %v1406 = vunpack.c.l.b16 %v1386
        %v1407 = vpack.c.b16 %v1400, %v1399
        %v1408 = vpack.c.b16 %v1402, %v1401
        %v1409 = vpack.c.b16 %v1404, %v1403
        %v1410 = vpack.c.b16 %v1406, %v1405
        %vm1415 = vcmask 523264
        %v1417 = vsel %vm1415, %v1378, 0
        %1419 = vmatprep.subr.bf16.mxu0 0
        %1420 = vmatpush1.bf16.msra.mxu0 0
        %1421 = vmatprep.subr.bf16.mxu0 0
        %1422 = vmatpush1.bf16.msra.mxu0 0
        %1423 = vmatprep.subr.bf16.mxu0 0
        %1424 = vmatpush1.bf16.msra.mxu0 0
        %1425 = vmatprep.subr.bf16.mxu0 0
        %1426 = vmatpush1.bf16.msra.mxu0 0
        %1427 = vmatprep.subr.bf16.mxu0 0
        %1428 = vmatpush1.bf16.msra.mxu0 %v1410
        %1429 = vmatprep.subr.bf16.mxu0 0
        %1430 = vmatpush1.bf16.msra.mxu0 %v1409
        %1431 = vmatprep.subr.bf16.mxu0 0
        %1432 = vmatpush1.bf16.msra.mxu0 %v1408
        %1433 = vmatprep.subr.bf16.mxu0 0
        %1434 = vmatpush1.bf16.msra.mxu0 %v1407
        %1435 = vmatprep.subr.bf16.mxu0 0
        %1436 = vmatpush2.bf16.msra.mxu0 0
        %1437 = vmatprep.subr.bf16.mxu0 0
        %1438 = vmatpush2.bf16.msra.mxu0 0
        %1439 = vmatprep.subr.bf16.mxu0 0
        %1440 = vmatpush2.bf16.msra.mxu0 0
        %1441 = vmatprep.subr.bf16.mxu0 0
        %1442 = vmatpush2.bf16.msra.mxu0 0
        %1443 = vmatprep.subr.bf16.mxu0 0
        %1444 = vmatpush2.bf16.msra.mxu0 0
        %1445 = vmatprep.subr.bf16.mxu0 0
        %1446 = vmatpush2.bf16.msra.mxu0 0
        %1447 = vmatprep.subr.bf16.mxu0 0
        %1448 = vmatpush2.bf16.msra.mxu0 0
        %1449 = vmatprep.subr.bf16.mxu0 0
        %1450 = vmatpush2.bf16.msra.mxu0 0
        %1451 = vmatprep.mubr.bf16.mxu0 0
        %1452 = vmatmul.mubr.bf16.gmra.mxu0 %v1417
        %v1453 = vpop.f32.mrf.mxu0
        %v1454 = vadd.f32 %v1390, %v1453
        %v1455 = vpop.f32.mrf.mxu0
        %v1456 = vpop.f32.mrf.mxu0
        %v1457 = vpop.f32.mrf.mxu0
        %1458 = vdwg.mxu0
        %v1459 = vadd.f32 %v1305, %v1454
        %v1460 = vsel %vm588, %v1459, 0.0
        %1461 = vadd.xlane.f32.xlu0 %v1460
        %v1462 = vpop.xlane.xlu0 %1461
        %v1463 = vmul.f32 %v1462, %v1285
        %v1464 = vsub.f32 %v1459, %v1463
        %v1465 = vmul.f32 %v1464, %v1464
        %v1466 = vsel %vm588, %v1465, 0.0
        %1467 = vadd.xlane.f32.xlu0 %v1466
        %v1468 = vpop.xlane.xlu0 %1467
        %v1469 = vmul.f32 %v1468, %v1285
        %v1470 = vlaneseq
        %v1471 = vshrl.u32 %v1470, 7
        %v1472 = vsub.s32 7, %v1471
        %v1473 = vrot.slane %v564, %v1472
        %v1474 = vmul.f32 %v1473, %v1464
        %v1475 = vadd.f32 %v1469, 1e-12
        %v1476 = vrsqrt.pop %v1475
        %v1477 = vmul.f32 %v1474, %v1476
        %v1478 = vlaneseq
        %v1479 = vshrl.u32 %v1478, 7
        %v1480 = vsub.s32 0, %v1479
        %v1481 = vrot.slane %v565, %v1480
        %v1482 = vadd.f32 %v1477, %v1481
        %1483 = vst.msk [vmem:[#allocation2] sm:$0xff] %vm588, %v1482
        %p1484 = scmp.eq.s32.totalorder %s32, 1
        // Predicated region
        $region69: #{tpu_custom_call.1} parent=59 // pred_check
          %p1485 = pneg %p1484
        $region70: #{tpu_custom_call.1} parent=59 // pred_check_branch
          %1487 = sbr.rel (%p1485) target = $region72
        $region71: #{tpu_custom_call.1} parent=59 // pred_region
          %1488 = vst.msk [vmem:[%s514] sm:$0xff] %vm588, %v1482
        $region72: #{tpu_custom_call.1} parent=59 // pred_fallthru
          _
        %s1489 = sand.u32 %s307, 1
        %s1490 = scalar_lea.sflag [#allocation5], %s1489
        %s1491 = sand.u32 %s307, 1
        %s1492 = smul.addr %s1491, 8
        %s1493 = scalar_lea.vmem [#allocation6], %s1492
        // Predicated region
        $region73: #{tpu_custom_call.1} parent=59 // pred_check
          %p1494 = pneg %p317
        $region74: #{tpu_custom_call.1} parent=59 // pred_check_branch
          %1496 = sbr.rel (%p1494) target = $region76
        $region75: #{tpu_custom_call.1} parent=59 // pred_region
          %s1498 = ssub.s32 128, 128
          %1499 = vsyncadd %s1490, %s1498
          %s1500 = smul.addr %s31, 128
          %s1501 = scalar_lea.hbm %s10, %s1500
          %s1503 = sshll.u32 %s1493, 4
          %s1504 = int_to_ptr.vmem [resolvable:$true] %s1503
          %1506 = dma.vmem_to_hbm [thread:$0]  %s1504, 128, %s1501, %s1490
        $region76: #{tpu_custom_call.1} parent=59 // pred_fallthru
          _
      $region60: #{tpu_custom_call.1} parent=5 // pred_fallthru
        _
      %p1507 = scmp.le.s32.totalorder 2, %s22
      // Predicated region
      $region77: #{tpu_custom_call.1} parent=5 // pred_check
        %p1508 = pneg %p1507
      $region78: #{tpu_custom_call.1} parent=5 // pred_check_branch
        %1510 = sbr.rel (%p1508) target = $region80
      $region79: #{tpu_custom_call.1} parent=5 // pred_region
        %s1511 = ssub.s32 %s22, 2
        // Predicated region
        $region81: #{tpu_custom_call.1} parent=79 // pred_check
          %p1512 = pneg %p323
        $region82: #{tpu_custom_call.1} parent=79 // pred_check_branch
          %1514 = sbr.rel (%p1512) target = $region84
        $region83: #{tpu_custom_call.1} parent=79 // pred_region
          %s1515 = sand.u32 %s308, 1
          %s1516 = scalar_lea.sflag [#allocation5], %s1515
          %s1517 = sand.u32 %s308, 1
          %s1518 = smul.addr %s1517, 8
          %s1519 = scalar_lea.vmem [#allocation6], %s1518
          %1520 = dma.done %s1516, 128
        $region84: #{tpu_custom_call.1} parent=79 // pred_fallthru
          _
      $region80: #{tpu_custom_call.1} parent=5 // pred_fallthru
        _
    $region6: #{tpu_custom_call.1} parent=1 // loop_footer
      %s26 = sadd.s32 1, %s22
    $region7: #{tpu_custom_call.1} parent=1 // loop_footer_branch
      %21 = sbr.rel target = $region3
    $region8: #{tpu_custom_call.1} parent=1 // loop_exit
      _
    %1521 = vsyncpa [#allocation4], 1
    %s1522 = scalar_lea.sflag [#allocation4], 1
    %1523 = vsyncpa %s1522, 1
    %1524 = vsyncpa [#allocation5], 1
    %s1525 = scalar_lea.sflag [#allocation5], 1
    %1526 = vsyncpa %s1525, 1

</llo_original>
